<compile_context>
chip_gen: v7x
topology: tpu7x:2x2x1
jax: 0.10.0
libtpu: 0.0.40
codegen_flags: <defaults>
</compile_context>

<pallas_src>
import functools

import jax
import jax.numpy as jnp
import numpy as np
from jax.experimental import pallas as pl
from jax.experimental.pallas import tpu as pltpu


def hrnn_kernel(xproj_ref, filt_ref, w_low_rec_ref, w_high_rec_ref, b_high_ref,
                hlow_seq_ref, hl_out, cl_out, hh_out, ch_out):
    """One grid step = one (batch-chunk, time-chunk); Tc timesteps unrolled."""
    t_idx = pl.program_id(1)
    nhid = hl_out.shape[-1]
    tc = xproj_ref.shape[0]

    # init_hidden(): zero state at the first time-chunk of each batch chunk.
    @pl.when(t_idx == 0)
    def _():
        hl_out[...] = jnp.zeros_like(hl_out)
        cl_out[...] = jnp.zeros_like(cl_out)
        hh_out[...] = jnp.zeros_like(hh_out)
        ch_out[...] = jnp.zeros_like(ch_out)

    w_low_rec = w_low_rec_ref[...]    # (2*nhid, 4*nhid): rows = [h_high ; h_low]
    w_high_rec = w_high_rec_ref[...]  # (2*nhid, 4*nhid): rows = [h_low ; h_high]
    b_high = b_high_ref[...]          # (1, 4*nhid)

    def gate_split(gates):
        # Full-width activations (2 EUP pushes) then lane slices; PyTorch LSTMCell
        # gate order is (i, f, g, o).
        sig = jax.nn.sigmoid(gates)
        th = jnp.tanh(gates)
        return (sig[:, 0 * nhid:1 * nhid], sig[:, 1 * nhid:2 * nhid],
                th[:, 2 * nhid:3 * nhid], sig[:, 3 * nhid:4 * nhid])

    def step(s, carry):
        h_low, c_low, h_high, c_high = carry
        xp = xproj_ref[s]            # (B, 4*nhid) = emb_t @ W_ih_low[:ninp] + b_low
        ft = filt_ref[s]             # (B, 1)   (x_t == measure_token_idx) as f32

        # low cell: one fused recurrent matmul over [h_high ; h_low]
        gl = xp + jnp.dot(jnp.concatenate([h_high, h_low], axis=-1), w_low_rec,
                          preferred_element_type=jnp.float32)
        i, f, g, o = gate_split(gl)
        c_low = f * c_low + i * g
        h_low = o * jnp.tanh(c_low)

        # high cell: one fused recurrent matmul over [h_low ; h_high]
        gh = jnp.dot(jnp.concatenate([h_low, h_high], axis=-1), w_high_rec,
                     preferred_element_type=jnp.float32) + b_high
        i2, f2, g2, o2 = gate_split(gh)
        c_high_tmp = f2 * c_high + i2 * g2
        h_high_tmp = o2 * jnp.tanh(c_high_tmp)
        h_high = ft * h_high_tmp + (1.0 - ft) * h_high
        c_high = ft * c_high_tmp + (1.0 - ft) * c_high

        hlow_seq_ref[s] = h_low      # per-step h_low for the hoisted decoder
        return h_low, c_low, h_high, c_high

    carry0 = (hl_out[...], cl_out[...], hh_out[...], ch_out[...])
    h_low, c_low, h_high, c_high = jax.lax.fori_loop(0, tc, step, carry0,
                                                     unroll=True)

    # write back final state (resident output blocks persist across time chunks)
    hl_out[...] = h_low
    cl_out[...] = c_low
    hh_out[...] = h_high
    ch_out[...] = c_high


def _pick_time_chunk(T, cap=16):
    """Largest divisor of T that is <= cap (keeps full-unroll code size sane)."""
    tc = 1
    for d in range(1, min(T, cap) + 1):
        if T % d == 0:
            tc = d
    return tc


@functools.partial(jax.jit, static_argnums=(2,))
def hrnn_forward(tokens, params, measure_token_idx):
    B, T = tokens.shape
    E = params["encoder"]
    ninp = E.shape[1]
    nhid = params["w_hh_low"].shape[0]
    ntoken = params["w_dec"].shape[1]
    hp = jax.lax.Precision.HIGHEST

    Tc = _pick_time_chunk(T)
    n_t = T // Tc
    Bc = B                     # for v7x with large B, split batch across the 2 TCs
    n_b = B // Bc

    # ---- hoisted dense prework (MXU-dense, plain XLA) -------------------------
    emb = jnp.take(E, tokens, axis=0)                     # (B, T, ninp)
    emb = jnp.transpose(emb, (1, 0, 2))                   # (T, B, ninp)
    # low-cell input projection does not depend on the recurrence
    x_proj = (jnp.einsum("tbi,ig->tbg", emb, params["w_ih_low"][:ninp],
                         precision=hp)
              + params["b_low"])                          # (T, B, 4*nhid)
    filt = (tokens == measure_token_idx).astype(jnp.float32)
    filt = jnp.transpose(filt, (1, 0))[:, :, None]        # (T, B, 1)

    # fused recurrent weights (one matmul per cell per step)
    w_low_rec = jnp.concatenate([params["w_ih_low"][ninp:], params["w_hh_low"]],
                                axis=0)                   # (2*nhid, 4*nhid)
    w_high_rec = jnp.concatenate([params["w_ih_high"], params["w_hh_high"]],
                                 axis=0)                  # (2*nhid, 4*nhid)
    b_high = params["b_high"]                             # (1, 4*nhid)

    # ---- recurrent Pallas kernel ----------------------------------------------
    out_shape = (
        jax.ShapeDtypeStruct((T, B, nhid), jnp.float32),  # h_low per timestep
        jax.ShapeDtypeStruct((B, nhid), jnp.float32),     # h_low final
        jax.ShapeDtypeStruct((B, nhid), jnp.float32),     # c_low final
        jax.ShapeDtypeStruct((B, nhid), jnp.float32),     # h_high final
        jax.ShapeDtypeStruct((B, nhid), jnp.float32),     # c_high final
    )

    def full_spec(a):
        nd = a.ndim
        return pl.BlockSpec(a.shape, lambda b, t, _n=nd: (0,) * _n)

    in_specs = [
        pl.BlockSpec((Tc, Bc, 4 * nhid), lambda b, t: (t, b, 0)),
        pl.BlockSpec((Tc, Bc, 1), lambda b, t: (t, b, 0)),
        full_spec(w_low_rec),
        full_spec(w_high_rec),
        full_spec(b_high),
    ]
    state_spec = pl.BlockSpec((Bc, nhid), lambda b, t: (b, 0))   # resident over t
    out_specs = (
        pl.BlockSpec((Tc, Bc, nhid), lambda b, t: (t, b, 0)),
        state_spec, state_spec, state_spec, state_spec,
    )

    hlow_seq, h_low, c_low, h_high, c_high = pl.pallas_call(
        hrnn_kernel,
        out_shape=out_shape,
        grid_spec=pltpu.PrefetchScalarGridSpec(
            num_scalar_prefetch=0,
            grid=(n_b, n_t),
            in_specs=in_specs,
            out_specs=out_specs,
        ),
        compiler_params=pltpu.CompilerParams(
            dimension_semantics=("parallel", "arbitrary")),
    )(x_proj, filt, w_low_rec, w_high_rec, b_high)

    # ---- hoisted decoder: one dense (B*T, nhid) @ (nhid, ntoken) matmul -------
    out = jnp.transpose(hlow_seq, (1, 0, 2)).reshape(B * T, nhid)
    decoded = (jnp.dot(out, params["w_dec"], precision=hp)
               + params["b_dec"]).reshape(B, T, ntoken)
    return decoded, ((h_low, c_low), (h_high, c_high))


def hrnn_reference(tokens, params, measure_token_idx):
    """Pure-JAX reference mirroring the PyTorch forward (eval mode)."""
    B, T = tokens.shape
    nhid = params["w_hh_low"].shape[0]
    E = params["encoder"]
    hp = jax.lax.Precision.HIGHEST

    def cell(x, h, c, w_ih, w_hh, b):
        gates = (jnp.dot(x, w_ih, precision=hp)
                 + jnp.dot(h, w_hh, precision=hp) + b)
        i = jax.nn.sigmoid(gates[:, 0 * nhid:1 * nhid])
        f = jax.nn.sigmoid(gates[:, 1 * nhid:2 * nhid])
        g = jnp.tanh(gates[:, 2 * nhid:3 * nhid])
        o = jax.nn.sigmoid(gates[:, 3 * nhid:4 * nhid])
        c_new = f * c + i * g
        return o * jnp.tanh(c_new), c_new

    hl = jnp.zeros((B, nhid), jnp.float32)
    cl = jnp.zeros((B, nhid), jnp.float32)
    hh = jnp.zeros((B, nhid), jnp.float32)
    ch = jnp.zeros((B, nhid), jnp.float32)
    outs = []
    for t in range(T):
        x_t = tokens[:, t]
        filt = (x_t == measure_token_idx).astype(jnp.float32)[:, None]
        emb_t = E[x_t]
        inp_t = jnp.concatenate([emb_t, hh], axis=-1)
        hl, cl = cell(inp_t, hl, cl,
                      params["w_ih_low"], params["w_hh_low"], params["b_low"])
        hh_tmp, ch_tmp = cell(hl, hh, ch,
                              params["w_ih_high"], params["w_hh_high"], params["b_high"])
        hh = filt * hh_tmp + (1.0 - filt) * hh
        ch = filt * ch_tmp + (1.0 - filt) * ch
        outs.append(hl)
    out = jnp.stack(outs, axis=1)                          # (B, T, nhid)
    dec = jnp.dot(out.reshape(B * T, nhid), params["w_dec"],
                  precision=hp) + params["b_dec"]
    return dec.reshape(B, T, -1), ((hl, cl), (hh, ch))


def init_params(key, ntoken, ninp, nhid):
    ks = jax.random.split(key, 8)
    initrange = 0.1
    stdv = 1.0 / np.sqrt(nhid)
    u = lambda k, shape, r: jax.random.uniform(k, shape, jnp.float32, -r, r)
    return {
        "encoder":   u(ks[0], (ntoken, ninp), initrange),
        # LSTMCell weights stored pre-transposed: (in_features, 4*nhid)
        "w_ih_low":  u(ks[1], (ninp + nhid, 4 * nhid), stdv),
        "w_hh_low":  u(ks[2], (nhid, 4 * nhid), stdv),
        "b_low":     u(ks[3], (1, 4 * nhid), stdv),        # b_ih + b_hh combined
        "w_ih_high": u(ks[4], (nhid, 4 * nhid), stdv),
        "w_hh_high": u(ks[5], (nhid, 4 * nhid), stdv),
        "b_high":    u(ks[6], (1, 4 * nhid), stdv),
        "w_dec":     u(ks[7], (nhid, ntoken), initrange),
        "b_dec":     jnp.zeros((1, ntoken), jnp.float32),
    }


if __name__ == "__main__":
    B, T = 8, 8
    ntoken, ninp, nhid = 96, 32, 32
    measure_token_idx = 3

    key = jax.random.PRNGKey(0)
    pkey, tkey = jax.random.split(key)
    params = init_params(pkey, ntoken, ninp, nhid)

    tokens = jax.random.randint(tkey, (B, T), 0, ntoken, dtype=jnp.int32)
    # make sure the measure-token gating path is exercised
    tokens = tokens.at[:, 3].set(measure_token_idx)

    dec, ((hl, cl), (hh, ch)) = hrnn_forward(tokens, params, measure_token_idx)
    jax.block_until_ready(dec)

    dec_ref, ((hl_r, cl_r), (hh_r, ch_r)) = hrnn_reference(tokens, params, measure_token_idx)
    np.testing.assert_allclose(np.asarray(dec), np.asarray(dec_ref), atol=5e-2, rtol=5e-2)
    np.testing.assert_allclose(np.asarray(hl), np.asarray(hl_r), atol=5e-2, rtol=5e-2)
    np.testing.assert_allclose(np.asarray(cl), np.asarray(cl_r), atol=5e-2, rtol=5e-2)
    np.testing.assert_allclose(np.asarray(hh), np.asarray(hh_r), atol=5e-2, rtol=5e-2)
    np.testing.assert_allclose(np.asarray(ch), np.asarray(ch_r), atol=5e-2, rtol=5e-2)

    assert dec.shape == (B, T, ntoken)
    print("KERNEL_OK")
</pallas_src>

<mosaic_0001>
module attributes {stable_mosaic.version = 11 : i64} {
  func.func @hrnn_kernel(%arg0: i32, %arg1: i32, %arg2: memref<8x8x128xf32, #tpu.memory_space<vmem>>, %arg3: memref<8x8x1xf32, #tpu.memory_space<vmem>>, %arg4: memref<64x128xf32, #tpu.memory_space<vmem>>, %arg5: memref<64x128xf32, #tpu.memory_space<vmem>>, %arg6: memref<1x128xf32, #tpu.memory_space<vmem>>, %arg7: memref<8x8x32xf32, #tpu.memory_space<vmem>>, %arg8: memref<8x32xf32, #tpu.memory_space<vmem>>, %arg9: memref<8x32xf32, #tpu.memory_space<vmem>>, %arg10: memref<8x32xf32, #tpu.memory_space<vmem>>, %arg11: memref<8x32xf32, #tpu.memory_space<vmem>>) attributes {dimension_semantics = [#tpu.dimension_semantics<parallel>, #tpu.dimension_semantics<arbitrary>], iteration_bounds = array<i64: 1, 1>, scalar_prefetch = 0 : i64, scratch_operands = 0 : i64, tpu.core_type = #tpu.core_type<tc>, window_params = [{transform_indices = @transform_0, window_bounds = array<i64: 8, 8, 128>}, {transform_indices = @transform_1, window_bounds = array<i64: 8, 8, 1>}, {pipeline_mode = #tpu.pipeline_mode<synchronous>, transform_indices = @transform_2, window_bounds = array<i64: 64, 128>}, {pipeline_mode = #tpu.pipeline_mode<synchronous>, transform_indices = @transform_3, window_bounds = array<i64: 64, 128>}, {pipeline_mode = #tpu.pipeline_mode<synchronous>, transform_indices = @transform_4, window_bounds = array<i64: 1, 128>}, {transform_indices = @transform_5, window_bounds = array<i64: 8, 8, 32>}, {transform_indices = @transform_6, window_bounds = array<i64: 8, 32>}, {transform_indices = @transform_7, window_bounds = array<i64: 8, 32>}, {transform_indices = @transform_8, window_bounds = array<i64: 8, 32>}, {transform_indices = @transform_9, window_bounds = array<i64: 8, 32>}]} {
    %c0_i32 = arith.constant 0 : i32
    %0 = arith.cmpi eq, %arg1, %c0_i32 : i32
    %1 = arith.extui %0 : i1 to i32
    %c0_i32_0 = arith.constant 0 : i32
    %2 = arith.cmpi ne, %1, %c0_i32_0 : i32
    scf.if %2 {
      %cst_118 = arith.constant 0.000000e+00 : f32
      %502 = vector.broadcast %cst_118 : f32 to vector<8x32xf32>
      %c0_119 = arith.constant 0 : index
      %c0_120 = arith.constant 0 : index
      %503 = vector.load %arg8[%c0_119, %c0_120] : memref<8x32xf32, #tpu.memory_space<vmem>>, vector<8x32xf32>
      tpu.vector_store %arg8[%c0_119, %c0_120], %502 {strides = array<i32>} : memref<8x32xf32, #tpu.memory_space<vmem>>, vector<8x32xf32>,
      %cst_121 = arith.constant 0.000000e+00 : f32
      %504 = vector.broadcast %cst_121 : f32 to vector<8x32xf32>
      %c0_122 = arith.constant 0 : index
      %c0_123 = arith.constant 0 : index
      %505 = vector.load %arg9[%c0_122, %c0_123] : memref<8x32xf32, #tpu.memory_space<vmem>>, vector<8x32xf32>
      tpu.vector_store %arg9[%c0_122, %c0_123], %504 {strides = array<i32>} : memref<8x32xf32, #tpu.memory_space<vmem>>, vector<8x32xf32>,
      %cst_124 = arith.constant 0.000000e+00 : f32
      %506 = vector.broadcast %cst_124 : f32 to vector<8x32xf32>
      %c0_125 = arith.constant 0 : index
      %c0_126 = arith.constant 0 : index
      %507 = vector.load %arg10[%c0_125, %c0_126] : memref<8x32xf32, #tpu.memory_space<vmem>>, vector<8x32xf32>
      tpu.vector_store %arg10[%c0_125, %c0_126], %506 {strides = array<i32>} : memref<8x32xf32, #tpu.memory_space<vmem>>, vector<8x32xf32>,
      %cst_127 = arith.constant 0.000000e+00 : f32
      %508 = vector.broadcast %cst_127 : f32 to vector<8x32xf32>
      %c0_128 = arith.constant 0 : index
      %c0_129 = arith.constant 0 : index
      %509 = vector.load %arg11[%c0_128, %c0_129] : memref<8x32xf32, #tpu.memory_space<vmem>>, vector<8x32xf32>
      tpu.vector_store %arg11[%c0_128, %c0_129], %508 {strides = array<i32>} : memref<8x32xf32, #tpu.memory_space<vmem>>, vector<8x32xf32>,
    } else {
    }
    %c0 = arith.constant 0 : index
    %c0_1 = arith.constant 0 : index
    %3 = vector.load %arg4[%c0, %c0_1] : memref<64x128xf32, #tpu.memory_space<vmem>>, vector<64x128xf32>
    %c0_2 = arith.constant 0 : index
    %c0_3 = arith.constant 0 : index
    %4 = vector.load %arg5[%c0_2, %c0_3] : memref<64x128xf32, #tpu.memory_space<vmem>>, vector<64x128xf32>
    %c0_4 = arith.constant 0 : index
    %c0_5 = arith.constant 0 : index
    %5 = vector.load %arg6[%c0_4, %c0_5] : memref<1x128xf32, #tpu.memory_space<vmem>>, vector<1x128xf32>
    %c0_6 = arith.constant 0 : index
    %c0_7 = arith.constant 0 : index
    %6 = vector.load %arg8[%c0_6, %c0_7] : memref<8x32xf32, #tpu.memory_space<vmem>>, vector<8x32xf32>
    %c0_8 = arith.constant 0 : index
    %c0_9 = arith.constant 0 : index
    %7 = vector.load %arg9[%c0_8, %c0_9] : memref<8x32xf32, #tpu.memory_space<vmem>>, vector<8x32xf32>
    %c0_10 = arith.constant 0 : index
    %c0_11 = arith.constant 0 : index
    %8 = vector.load %arg10[%c0_10, %c0_11] : memref<8x32xf32, #tpu.memory_space<vmem>>, vector<8x32xf32>
    %c0_12 = arith.constant 0 : index
    %c0_13 = arith.constant 0 : index
    %9 = vector.load %arg11[%c0_12, %c0_13] : memref<8x32xf32, #tpu.memory_space<vmem>>, vector<8x32xf32>
    %c0_i32_14 = arith.constant 0 : i32
    %10 = arith.index_cast %c0_i32_14 : i32 to index
    %c0_15 = arith.constant 0 : index
    %c0_16 = arith.constant 0 : index
    %11 = vector.load %arg2[%10, %c0_15, %c0_16] : memref<8x8x128xf32, #tpu.memory_space<vmem>>, vector<1x8x128xf32>
    %12 = vector.shape_cast %11 : vector<1x8x128xf32> to vector<8x128xf32>
    %13 = arith.index_cast %c0_i32_14 : i32 to index
    %c0_17 = arith.constant 0 : index
    %c0_18 = arith.constant 0 : index
    %14 = vector.load %arg3[%13, %c0_17, %c0_18] : memref<8x8x1xf32, #tpu.memory_space<vmem>>, vector<1x8x1xf32>
    %15 = vector.shape_cast %14 : vector<1x8x1xf32> to vector<8x1xf32>
    %16 = tpu.concatenate %8, %6 in 1 : vector<8x32xf32>, vector<8x32xf32> -> vector<8x64xf32>
    %cst = arith.constant dense<0.000000e+00> : vector<8x128xf32>
    %17 = tpu.matmul %16, %3, %cst {dimension_numbers = #tpu.dot_dimension_numbers<[1], [0], [0], [1], [0, 0, 1, 1], [], []>} : vector<8x64xf32>, vector<64x128xf32>, vector<8x128xf32> -> vector<8x128xf32>
    %18 = arith.addf %12, %17 : vector<8x128xf32>
    %19 = arith.negf %18 : vector<8x128xf32>
    %20 = math.exp %19 : vector<8x128xf32>
    %cst_19 = arith.constant 1.000000e+00 : f32
    %21 = vector.broadcast %cst_19 : f32 to vector<8x128xf32>
    %22 = arith.addf %21, %20 : vector<8x128xf32>
    %23 = arith.divf %21, %22 : vector<8x128xf32>
    %24 = math.tanh %18 : vector<8x128xf32>
    %25 = vector.extract_strided_slice %23 {offsets = [0, 0], sizes = [8, 32], strides = [1, 1]} : vector<8x128xf32> to vector<8x32xf32>
    %26 = vector.extract_strided_slice %23 {offsets = [0, 32], sizes = [8, 32], strides = [1, 1]} : vector<8x128xf32> to vector<8x32xf32>
    %27 = vector.extract_strided_slice %24 {offsets = [0, 64], sizes = [8, 32], strides = [1, 1]} : vector<8x128xf32> to vector<8x32xf32>
    %28 = vector.extract_strided_slice %23 {offsets = [0, 96], sizes = [8, 32], strides = [1, 1]} : vector<8x128xf32> to vector<8x32xf32>
    %29 = arith.mulf %26, %7 : vector<8x32xf32>
    %30 = arith.mulf %25, %27 : vector<8x32xf32>
    %31 = arith.addf %29, %30 : vector<8x32xf32>
    %32 = math.tanh %31 : vector<8x32xf32>
    %33 = arith.mulf %28, %32 : vector<8x32xf32>
    %34 = tpu.concatenate %33, %8 in 1 : vector<8x32xf32>, vector<8x32xf32> -> vector<8x64xf32>
    %cst_20 = arith.constant dense<0.000000e+00> : vector<8x128xf32>
    %35 = tpu.matmul %34, %4, %cst_20 {dimension_numbers = #tpu.dot_dimension_numbers<[1], [0], [0], [1], [0, 0, 1, 1], [], []>} : vector<8x64xf32>, vector<64x128xf32>, vector<8x128xf32> -> vector<8x128xf32>
    %36 = vector.broadcast %5 : vector<1x128xf32> to vector<8x128xf32>
    %37 = arith.addf %35, %36 : vector<8x128xf32>
    %38 = arith.negf %37 : vector<8x128xf32>
    %39 = math.exp %38 : vector<8x128xf32>
    %cst_21 = arith.constant 1.000000e+00 : f32
    %40 = vector.broadcast %cst_21 : f32 to vector<8x128xf32>
    %41 = arith.addf %40, %39 : vector<8x128xf32>
    %42 = arith.divf %40, %41 : vector<8x128xf32>
    %43 = math.tanh %37 : vector<8x128xf32>
    %44 = vector.extract_strided_slice %42 {offsets = [0, 0], sizes = [8, 32], strides = [1, 1]} : vector<8x128xf32> to vector<8x32xf32>
    %45 = vector.extract_strided_slice %42 {offsets = [0, 32], sizes = [8, 32], strides = [1, 1]} : vector<8x128xf32> to vector<8x32xf32>
    %46 = vector.extract_strided_slice %43 {offsets = [0, 64], sizes = [8, 32], strides = [1, 1]} : vector<8x128xf32> to vector<8x32xf32>
    %47 = vector.extract_strided_slice %42 {offsets = [0, 96], sizes = [8, 32], strides = [1, 1]} : vector<8x128xf32> to vector<8x32xf32>
    %48 = arith.mulf %45, %9 : vector<8x32xf32>
    %49 = arith.mulf %44, %46 : vector<8x32xf32>
    %50 = arith.addf %48, %49 : vector<8x32xf32>
    %51 = math.tanh %50 : vector<8x32xf32>
    %52 = arith.mulf %47, %51 : vector<8x32xf32>
    %53 = vector.broadcast %15 : vector<8x1xf32> to vector<8x32xf32>
    %54 = arith.mulf %53, %52 : vector<8x32xf32>
    %cst_22 = arith.constant 1.000000e+00 : f32
    %55 = vector.broadcast %cst_22 : f32 to vector<8x1xf32>
    %56 = arith.subf %55, %15 : vector<8x1xf32>
    %57 = vector.broadcast %56 : vector<8x1xf32> to vector<8x32xf32>
    %58 = arith.mulf %57, %8 : vector<8x32xf32>
    %59 = arith.addf %54, %58 : vector<8x32xf32>
    %60 = vector.broadcast %15 : vector<8x1xf32> to vector<8x32xf32>
    %61 = arith.mulf %60, %50 : vector<8x32xf32>
    %cst_23 = arith.constant 1.000000e+00 : f32
    %62 = vector.broadcast %cst_23 : f32 to vector<8x1xf32>
    %63 = arith.subf %62, %15 : vector<8x1xf32>
    %64 = vector.broadcast %63 : vector<8x1xf32> to vector<8x32xf32>
    %65 = arith.mulf %64, %9 : vector<8x32xf32>
    %66 = arith.addf %61, %65 : vector<8x32xf32>
    %67 = arith.index_cast %c0_i32_14 : i32 to index
    %c0_24 = arith.constant 0 : index
    %c0_25 = arith.constant 0 : index
    %68 = vector.load %arg7[%67, %c0_24, %c0_25] : memref<8x8x32xf32, #tpu.memory_space<vmem>>, vector<1x8x32xf32>
    %69 = vector.shape_cast %68 : vector<1x8x32xf32> to vector<8x32xf32>
    %70 = vector.shape_cast %33 : vector<8x32xf32> to vector<1x8x32xf32>
    tpu.vector_store %arg7[%67, %c0_24, %c0_25], %70 {strides = array<i32>} : memref<8x8x32xf32, #tpu.memory_space<vmem>>, vector<1x8x32xf32>,
    %c1_i32 = arith.constant 1 : i32
    %71 = arith.index_cast %c1_i32 : i32 to index
    %c0_26 = arith.constant 0 : index
    %c0_27 = arith.constant 0 : index
    %72 = vector.load %arg2[%71, %c0_26, %c0_27] : memref<8x8x128xf32, #tpu.memory_space<vmem>>, vector<1x8x128xf32>
    %73 = vector.shape_cast %72 : vector<1x8x128xf32> to vector<8x128xf32>
    %74 = arith.index_cast %c1_i32 : i32 to index
    %c0_28 = arith.constant 0 : index
    %c0_29 = arith.constant 0 : index
    %75 = vector.load %arg3[%74, %c0_28, %c0_29] : memref<8x8x1xf32, #tpu.memory_space<vmem>>, vector<1x8x1xf32>
    %76 = vector.shape_cast %75 : vector<1x8x1xf32> to vector<8x1xf32>
    %77 = tpu.concatenate %59, %33 in 1 : vector<8x32xf32>, vector<8x32xf32> -> vector<8x64xf32>
    %cst_30 = arith.constant dense<0.000000e+00> : vector<8x128xf32>
    %78 = tpu.matmul %77, %3, %cst_30 {dimension_numbers = #tpu.dot_dimension_numbers<[1], [0], [0], [1], [0, 0, 1, 1], [], []>} : vector<8x64xf32>, vector<64x128xf32>, vector<8x128xf32> -> vector<8x128xf32>
    %79 = arith.addf %73, %78 : vector<8x128xf32>
    %80 = arith.negf %79 : vector<8x128xf32>
    %81 = math.exp %80 : vector<8x128xf32>
    %cst_31 = arith.constant 1.000000e+00 : f32
    %82 = vector.broadcast %cst_31 : f32 to vector<8x128xf32>
    %83 = arith.addf %82, %81 : vector<8x128xf32>
    %84 = arith.divf %82, %83 : vector<8x128xf32>
    %85 = math.tanh %79 : vector<8x128xf32>
    %86 = vector.extract_strided_slice %84 {offsets = [0, 0], sizes = [8, 32], strides = [1, 1]} : vector<8x128xf32> to vector<8x32xf32>
    %87 = vector.extract_strided_slice %84 {offsets = [0, 32], sizes = [8, 32], strides = [1, 1]} : vector<8x128xf32> to vector<8x32xf32>
    %88 = vector.extract_strided_slice %85 {offsets = [0, 64], sizes = [8, 32], strides = [1, 1]} : vector<8x128xf32> to vector<8x32xf32>
    %89 = vector.extract_strided_slice %84 {offsets = [0, 96], sizes = [8, 32], strides = [1, 1]} : vector<8x128xf32> to vector<8x32xf32>
    %90 = arith.mulf %87, %31 : vector<8x32xf32>
    %91 = arith.mulf %86, %88 : vector<8x32xf32>
    %92 = arith.addf %90, %91 : vector<8x32xf32>
    %93 = math.tanh %92 : vector<8x32xf32>
    %94 = arith.mulf %89, %93 : vector<8x32xf32>
    %95 = tpu.concatenate %94, %59 in 1 : vector<8x32xf32>, vector<8x32xf32> -> vector<8x64xf32>
    %cst_32 = arith.constant dense<0.000000e+00> : vector<8x128xf32>
    %96 = tpu.matmul %95, %4, %cst_32 {dimension_numbers = #tpu.dot_dimension_numbers<[1], [0], [0], [1], [0, 0, 1, 1], [], []>} : vector<8x64xf32>, vector<64x128xf32>, vector<8x128xf32> -> vector<8x128xf32>
    %97 = vector.broadcast %5 : vector<1x128xf32> to vector<8x128xf32>
    %98 = arith.addf %96, %97 : vector<8x128xf32>
    %99 = arith.negf %98 : vector<8x128xf32>
    %100 = math.exp %99 : vector<8x128xf32>
    %cst_33 = arith.constant 1.000000e+00 : f32
    %101 = vector.broadcast %cst_33 : f32 to vector<8x128xf32>
    %102 = arith.addf %101, %100 : vector<8x128xf32>
    %103 = arith.divf %101, %102 : vector<8x128xf32>
    %104 = math.tanh %98 : vector<8x128xf32>
    %105 = vector.extract_strided_slice %103 {offsets = [0, 0], sizes = [8, 32], strides = [1, 1]} : vector<8x128xf32> to vector<8x32xf32>
    %106 = vector.extract_strided_slice %103 {offsets = [0, 32], sizes = [8, 32], strides = [1, 1]} : vector<8x128xf32> to vector<8x32xf32>
    %107 = vector.extract_strided_slice %104 {offsets = [0, 64], sizes = [8, 32], strides = [1, 1]} : vector<8x128xf32> to vector<8x32xf32>
    %108 = vector.extract_strided_slice %103 {offsets = [0, 96], sizes = [8, 32], strides = [1, 1]} : vector<8x128xf32> to vector<8x32xf32>
    %109 = arith.mulf %106, %66 : vector<8x32xf32>
    %110 = arith.mulf %105, %107 : vector<8x32xf32>
    %111 = arith.addf %109, %110 : vector<8x32xf32>
    %112 = math.tanh %111 : vector<8x32xf32>
    %113 = arith.mulf %108, %112 : vector<8x32xf32>
    %114 = vector.broadcast %76 : vector<8x1xf32> to vector<8x32xf32>
    %115 = arith.mulf %114, %113 : vector<8x32xf32>
    %cst_34 = arith.constant 1.000000e+00 : f32
    %116 = vector.broadcast %cst_34 : f32 to vector<8x1xf32>
    %117 = arith.subf %116, %76 : vector<8x1xf32>
    %118 = vector.broadcast %117 : vector<8x1xf32> to vector<8x32xf32>
    %119 = arith.mulf %118, %59 : vector<8x32xf32>
    %120 = arith.addf %115, %119 : vector<8x32xf32>
    %121 = vector.broadcast %76 : vector<8x1xf32> to vector<8x32xf32>
    %122 = arith.mulf %121, %111 : vector<8x32xf32>
    %cst_35 = arith.constant 1.000000e+00 : f32
    %123 = vector.broadcast %cst_35 : f32 to vector<8x1xf32>
    %124 = arith.subf %123, %76 : vector<8x1xf32>
    %125 = vector.broadcast %124 : vector<8x1xf32> to vector<8x32xf32>
    %126 = arith.mulf %125, %66 : vector<8x32xf32>
    %127 = arith.addf %122, %126 : vector<8x32xf32>
    %128 = arith.index_cast %c1_i32 : i32 to index
    %c0_36 = arith.constant 0 : index
    %c0_37 = arith.constant 0 : index
    %129 = vector.load %arg7[%128, %c0_36, %c0_37] : memref<8x8x32xf32, #tpu.memory_space<vmem>>, vector<1x8x32xf32>
    %130 = vector.shape_cast %129 : vector<1x8x32xf32> to vector<8x32xf32>
    %131 = vector.shape_cast %94 : vector<8x32xf32> to vector<1x8x32xf32>
    tpu.vector_store %arg7[%128, %c0_36, %c0_37], %131 {strides = array<i32>} : memref<8x8x32xf32, #tpu.memory_space<vmem>>, vector<1x8x32xf32>,
    %c2_i32 = arith.constant 2 : i32
    %132 = arith.index_cast %c2_i32 : i32 to index
    %c0_38 = arith.constant 0 : index
    %c0_39 = arith.constant 0 : index
    %133 = vector.load %arg2[%132, %c0_38, %c0_39] : memref<8x8x128xf32, #tpu.memory_space<vmem>>, vector<1x8x128xf32>
    %134 = vector.shape_cast %133 : vector<1x8x128xf32> to vector<8x128xf32>
    %135 = arith.index_cast %c2_i32 : i32 to index
    %c0_40 = arith.constant 0 : index
    %c0_41 = arith.constant 0 : index
    %136 = vector.load %arg3[%135, %c0_40, %c0_41] : memref<8x8x1xf32, #tpu.memory_space<vmem>>, vector<1x8x1xf32>
    %137 = vector.shape_cast %136 : vector<1x8x1xf32> to vector<8x1xf32>
    %138 = tpu.concatenate %120, %94 in 1 : vector<8x32xf32>, vector<8x32xf32> -> vector<8x64xf32>
    %cst_42 = arith.constant dense<0.000000e+00> : vector<8x128xf32>
    %139 = tpu.matmul %138, %3, %cst_42 {dimension_numbers = #tpu.dot_dimension_numbers<[1], [0], [0], [1], [0, 0, 1, 1], [], []>} : vector<8x64xf32>, vector<64x128xf32>, vector<8x128xf32> -> vector<8x128xf32>
    %140 = arith.addf %134, %139 : vector<8x128xf32>
    %141 = arith.negf %140 : vector<8x128xf32>
    %142 = math.exp %141 : vector<8x128xf32>
    %cst_43 = arith.constant 1.000000e+00 : f32
    %143 = vector.broadcast %cst_43 : f32 to vector<8x128xf32>
    %144 = arith.addf %143, %142 : vector<8x128xf32>
    %145 = arith.divf %143, %144 : vector<8x128xf32>
    %146 = math.tanh %140 : vector<8x128xf32>
    %147 = vector.extract_strided_slice %145 {offsets = [0, 0], sizes = [8, 32], strides = [1, 1]} : vector<8x128xf32> to vector<8x32xf32>
    %148 = vector.extract_strided_slice %145 {offsets = [0, 32], sizes = [8, 32], strides = [1, 1]} : vector<8x128xf32> to vector<8x32xf32>
    %149 = vector.extract_strided_slice %146 {offsets = [0, 64], sizes = [8, 32], strides = [1, 1]} : vector<8x128xf32> to vector<8x32xf32>
    %150 = vector.extract_strided_slice %145 {offsets = [0, 96], sizes = [8, 32], strides = [1, 1]} : vector<8x128xf32> to vector<8x32xf32>
    %151 = arith.mulf %148, %92 : vector<8x32xf32>
    %152 = arith.mulf %147, %149 : vector<8x32xf32>
    %153 = arith.addf %151, %152 : vector<8x32xf32>
    %154 = math.tanh %153 : vector<8x32xf32>
    %155 = arith.mulf %150, %154 : vector<8x32xf32>
    %156 = tpu.concatenate %155, %120 in 1 : vector<8x32xf32>, vector<8x32xf32> -> vector<8x64xf32>
    %cst_44 = arith.constant dense<0.000000e+00> : vector<8x128xf32>
    %157 = tpu.matmul %156, %4, %cst_44 {dimension_numbers = #tpu.dot_dimension_numbers<[1], [0], [0], [1], [0, 0, 1, 1], [], []>} : vector<8x64xf32>, vector<64x128xf32>, vector<8x128xf32> -> vector<8x128xf32>
    %158 = vector.broadcast %5 : vector<1x128xf32> to vector<8x128xf32>
    %159 = arith.addf %157, %158 : vector<8x128xf32>
    %160 = arith.negf %159 : vector<8x128xf32>
    %161 = math.exp %160 : vector<8x128xf32>
    %cst_45 = arith.constant 1.000000e+00 : f32
    %162 = vector.broadcast %cst_45 : f32 to vector<8x128xf32>
    %163 = arith.addf %162, %161 : vector<8x128xf32>
    %164 = arith.divf %162, %163 : vector<8x128xf32>
    %165 = math.tanh %159 : vector<8x128xf32>
    %166 = vector.extract_strided_slice %164 {offsets = [0, 0], sizes = [8, 32], strides = [1, 1]} : vector<8x128xf32> to vector<8x32xf32>
    %167 = vector.extract_strided_slice %164 {offsets = [0, 32], sizes = [8, 32], strides = [1, 1]} : vector<8x128xf32> to vector<8x32xf32>
    %168 = vector.extract_strided_slice %165 {offsets = [0, 64], sizes = [8, 32], strides = [1, 1]} : vector<8x128xf32> to vector<8x32xf32>
    %169 = vector.extract_strided_slice %164 {offsets = [0, 96], sizes = [8, 32], strides = [1, 1]} : vector<8x128xf32> to vector<8x32xf32>
    %170 = arith.mulf %167, %127 : vector<8x32xf32>
    %171 = arith.mulf %166, %168 : vector<8x32xf32>
    %172 = arith.addf %170, %171 : vector<8x32xf32>
    %173 = math.tanh %172 : vector<8x32xf32>
    %174 = arith.mulf %169, %173 : vector<8x32xf32>
    %175 = vector.broadcast %137 : vector<8x1xf32> to vector<8x32xf32>
    %176 = arith.mulf %175, %174 : vector<8x32xf32>
    %cst_46 = arith.constant 1.000000e+00 : f32
    %177 = vector.broadcast %cst_46 : f32 to vector<8x1xf32>
    %178 = arith.subf %177, %137 : vector<8x1xf32>
    %179 = vector.broadcast %178 : vector<8x1xf32> to vector<8x32xf32>
    %180 = arith.mulf %179, %120 : vector<8x32xf32>
    %181 = arith.addf %176, %180 : vector<8x32xf32>
    %182 = vector.broadcast %137 : vector<8x1xf32> to vector<8x32xf32>
    %183 = arith.mulf %182, %172 : vector<8x32xf32>
    %cst_47 = arith.constant 1.000000e+00 : f32
    %184 = vector.broadcast %cst_47 : f32 to vector<8x1xf32>
    %185 = arith.subf %184, %137 : vector<8x1xf32>
    %186 = vector.broadcast %185 : vector<8x1xf32> to vector<8x32xf32>
    %187 = arith.mulf %186, %127 : vector<8x32xf32>
    %188 = arith.addf %183, %187 : vector<8x32xf32>
    %189 = arith.index_cast %c2_i32 : i32 to index
    %c0_48 = arith.constant 0 : index
    %c0_49 = arith.constant 0 : index
    %190 = vector.load %arg7[%189, %c0_48, %c0_49] : memref<8x8x32xf32, #tpu.memory_space<vmem>>, vector<1x8x32xf32>
    %191 = vector.shape_cast %190 : vector<1x8x32xf32> to vector<8x32xf32>
    %192 = vector.shape_cast %155 : vector<8x32xf32> to vector<1x8x32xf32>
    tpu.vector_store %arg7[%189, %c0_48, %c0_49], %192 {strides = array<i32>} : memref<8x8x32xf32, #tpu.memory_space<vmem>>, vector<1x8x32xf32>,
    %c3_i32 = arith.constant 3 : i32
    %193 = arith.index_cast %c3_i32 : i32 to index
    %c0_50 = arith.constant 0 : index
    %c0_51 = arith.constant 0 : index
    %194 = vector.load %arg2[%193, %c0_50, %c0_51] : memref<8x8x128xf32, #tpu.memory_space<vmem>>, vector<1x8x128xf32>
    %195 = vector.shape_cast %194 : vector<1x8x128xf32> to vector<8x128xf32>
    %196 = arith.index_cast %c3_i32 : i32 to index
    %c0_52 = arith.constant 0 : index
    %c0_53 = arith.constant 0 : index
    %197 = vector.load %arg3[%196, %c0_52, %c0_53] : memref<8x8x1xf32, #tpu.memory_space<vmem>>, vector<1x8x1xf32>
    %198 = vector.shape_cast %197 : vector<1x8x1xf32> to vector<8x1xf32>
    %199 = tpu.concatenate %181, %155 in 1 : vector<8x32xf32>, vector<8x32xf32> -> vector<8x64xf32>
    %cst_54 = arith.constant dense<0.000000e+00> : vector<8x128xf32>
    %200 = tpu.matmul %199, %3, %cst_54 {dimension_numbers = #tpu.dot_dimension_numbers<[1], [0], [0], [1], [0, 0, 1, 1], [], []>} : vector<8x64xf32>, vector<64x128xf32>, vector<8x128xf32> -> vector<8x128xf32>
    %201 = arith.addf %195, %200 : vector<8x128xf32>
    %202 = arith.negf %201 : vector<8x128xf32>
    %203 = math.exp %202 : vector<8x128xf32>
    %cst_55 = arith.constant 1.000000e+00 : f32
    %204 = vector.broadcast %cst_55 : f32 to vector<8x128xf32>
    %205 = arith.addf %204, %203 : vector<8x128xf32>
    %206 = arith.divf %204, %205 : vector<8x128xf32>
    %207 = math.tanh %201 : vector<8x128xf32>
    %208 = vector.extract_strided_slice %206 {offsets = [0, 0], sizes = [8, 32], strides = [1, 1]} : vector<8x128xf32> to vector<8x32xf32>
    %209 = vector.extract_strided_slice %206 {offsets = [0, 32], sizes = [8, 32], strides = [1, 1]} : vector<8x128xf32> to vector<8x32xf32>
    %210 = vector.extract_strided_slice %207 {offsets = [0, 64], sizes = [8, 32], strides = [1, 1]} : vector<8x128xf32> to vector<8x32xf32>
    %211 = vector.extract_strided_slice %206 {offsets = [0, 96], sizes = [8, 32], strides = [1, 1]} : vector<8x128xf32> to vector<8x32xf32>
    %212 = arith.mulf %209, %153 : vector<8x32xf32>
    %213 = arith.mulf %208, %210 : vector<8x32xf32>
    %214 = arith.addf %212, %213 : vector<8x32xf32>
    %215 = math.tanh %214 : vector<8x32xf32>
    %216 = arith.mulf %211, %215 : vector<8x32xf32>
    %217 = tpu.concatenate %216, %181 in 1 : vector<8x32xf32>, vector<8x32xf32> -> vector<8x64xf32>
    %cst_56 = arith.constant dense<0.000000e+00> : vector<8x128xf32>
    %218 = tpu.matmul %217, %4, %cst_56 {dimension_numbers = #tpu.dot_dimension_numbers<[1], [0], [0], [1], [0, 0, 1, 1], [], []>} : vector<8x64xf32>, vector<64x128xf32>, vector<8x128xf32> -> vector<8x128xf32>
    %219 = vector.broadcast %5 : vector<1x128xf32> to vector<8x128xf32>
    %220 = arith.addf %218, %219 : vector<8x128xf32>
    %221 = arith.negf %220 : vector<8x128xf32>
    %222 = math.exp %221 : vector<8x128xf32>
    %cst_57 = arith.constant 1.000000e+00 : f32
    %223 = vector.broadcast %cst_57 : f32 to vector<8x128xf32>
    %224 = arith.addf %223, %222 : vector<8x128xf32>
    %225 = arith.divf %223, %224 : vector<8x128xf32>
    %226 = math.tanh %220 : vector<8x128xf32>
    %227 = vector.extract_strided_slice %225 {offsets = [0, 0], sizes = [8, 32], strides = [1, 1]} : vector<8x128xf32> to vector<8x32xf32>
    %228 = vector.extract_strided_slice %225 {offsets = [0, 32], sizes = [8, 32], strides = [1, 1]} : vector<8x128xf32> to vector<8x32xf32>
    %229 = vector.extract_strided_slice %226 {offsets = [0, 64], sizes = [8, 32], strides = [1, 1]} : vector<8x128xf32> to vector<8x32xf32>
    %230 = vector.extract_strided_slice %225 {offsets = [0, 96], sizes = [8, 32], strides = [1, 1]} : vector<8x128xf32> to vector<8x32xf32>
    %231 = arith.mulf %228, %188 : vector<8x32xf32>
    %232 = arith.mulf %227, %229 : vector<8x32xf32>
    %233 = arith.addf %231, %232 : vector<8x32xf32>
    %234 = math.tanh %233 : vector<8x32xf32>
    %235 = arith.mulf %230, %234 : vector<8x32xf32>
    %236 = vector.broadcast %198 : vector<8x1xf32> to vector<8x32xf32>
    %237 = arith.mulf %236, %235 : vector<8x32xf32>
    %cst_58 = arith.constant 1.000000e+00 : f32
    %238 = vector.broadcast %cst_58 : f32 to vector<8x1xf32>
    %239 = arith.subf %238, %198 : vector<8x1xf32>
    %240 = vector.broadcast %239 : vector<8x1xf32> to vector<8x32xf32>
    %241 = arith.mulf %240, %181 : vector<8x32xf32>
    %242 = arith.addf %237, %241 : vector<8x32xf32>
    %243 = vector.broadcast %198 : vector<8x1xf32> to vector<8x32xf32>
    %244 = arith.mulf %243, %233 : vector<8x32xf32>
    %cst_59 = arith.constant 1.000000e+00 : f32
    %245 = vector.broadcast %cst_59 : f32 to vector<8x1xf32>
    %246 = arith.subf %245, %198 : vector<8x1xf32>
    %247 = vector.broadcast %246 : vector<8x1xf32> to vector<8x32xf32>
    %248 = arith.mulf %247, %188 : vector<8x32xf32>
    %249 = arith.addf %244, %248 : vector<8x32xf32>
    %250 = arith.index_cast %c3_i32 : i32 to index
    %c0_60 = arith.constant 0 : index
    %c0_61 = arith.constant 0 : index
    %251 = vector.load %arg7[%250, %c0_60, %c0_61] : memref<8x8x32xf32, #tpu.memory_space<vmem>>, vector<1x8x32xf32>
    %252 = vector.shape_cast %251 : vector<1x8x32xf32> to vector<8x32xf32>
    %253 = vector.shape_cast %216 : vector<8x32xf32> to vector<1x8x32xf32>
    tpu.vector_store %arg7[%250, %c0_60, %c0_61], %253 {strides = array<i32>} : memref<8x8x32xf32, #tpu.memory_space<vmem>>, vector<1x8x32xf32>,
    %c4_i32 = arith.constant 4 : i32
    %254 = arith.index_cast %c4_i32 : i32 to index
    %c0_62 = arith.constant 0 : index
    %c0_63 = arith.constant 0 : index
    %255 = vector.load %arg2[%254, %c0_62, %c0_63] : memref<8x8x128xf32, #tpu.memory_space<vmem>>, vector<1x8x128xf32>
    %256 = vector.shape_cast %255 : vector<1x8x128xf32> to vector<8x128xf32>
    %257 = arith.index_cast %c4_i32 : i32 to index
    %c0_64 = arith.constant 0 : index
    %c0_65 = arith.constant 0 : index
    %258 = vector.load %arg3[%257, %c0_64, %c0_65] : memref<8x8x1xf32, #tpu.memory_space<vmem>>, vector<1x8x1xf32>
    %259 = vector.shape_cast %258 : vector<1x8x1xf32> to vector<8x1xf32>
    %260 = tpu.concatenate %242, %216 in 1 : vector<8x32xf32>, vector<8x32xf32> -> vector<8x64xf32>
    %cst_66 = arith.constant dense<0.000000e+00> : vector<8x128xf32>
    %261 = tpu.matmul %260, %3, %cst_66 {dimension_numbers = #tpu.dot_dimension_numbers<[1], [0], [0], [1], [0, 0, 1, 1], [], []>} : vector<8x64xf32>, vector<64x128xf32>, vector<8x128xf32> -> vector<8x128xf32>
    %262 = arith.addf %256, %261 : vector<8x128xf32>
    %263 = arith.negf %262 : vector<8x128xf32>
    %264 = math.exp %263 : vector<8x128xf32>
    %cst_67 = arith.constant 1.000000e+00 : f32
    %265 = vector.broadcast %cst_67 : f32 to vector<8x128xf32>
    %266 = arith.addf %265, %264 : vector<8x128xf32>
    %267 = arith.divf %265, %266 : vector<8x128xf32>
    %268 = math.tanh %262 : vector<8x128xf32>
    %269 = vector.extract_strided_slice %267 {offsets = [0, 0], sizes = [8, 32], strides = [1, 1]} : vector<8x128xf32> to vector<8x32xf32>
    %270 = vector.extract_strided_slice %267 {offsets = [0, 32], sizes = [8, 32], strides = [1, 1]} : vector<8x128xf32> to vector<8x32xf32>
    %271 = vector.extract_strided_slice %268 {offsets = [0, 64], sizes = [8, 32], strides = [1, 1]} : vector<8x128xf32> to vector<8x32xf32>
    %272 = vector.extract_strided_slice %267 {offsets = [0, 96], sizes = [8, 32], strides = [1, 1]} : vector<8x128xf32> to vector<8x32xf32>
    %273 = arith.mulf %270, %214 : vector<8x32xf32>
    %274 = arith.mulf %269, %271 : vector<8x32xf32>
    %275 = arith.addf %273, %274 : vector<8x32xf32>
    %276 = math.tanh %275 : vector<8x32xf32>
    %277 = arith.mulf %272, %276 : vector<8x32xf32>
    %278 = tpu.concatenate %277, %242 in 1 : vector<8x32xf32>, vector<8x32xf32> -> vector<8x64xf32>
    %cst_68 = arith.constant dense<0.000000e+00> : vector<8x128xf32>
    %279 = tpu.matmul %278, %4, %cst_68 {dimension_numbers = #tpu.dot_dimension_numbers<[1], [0], [0], [1], [0, 0, 1, 1], [], []>} : vector<8x64xf32>, vector<64x128xf32>, vector<8x128xf32> -> vector<8x128xf32>
    %280 = vector.broadcast %5 : vector<1x128xf32> to vector<8x128xf32>
    %281 = arith.addf %279, %280 : vector<8x128xf32>
    %282 = arith.negf %281 : vector<8x128xf32>
    %283 = math.exp %282 : vector<8x128xf32>
    %cst_69 = arith.constant 1.000000e+00 : f32
    %284 = vector.broadcast %cst_69 : f32 to vector<8x128xf32>
    %285 = arith.addf %284, %283 : vector<8x128xf32>
    %286 = arith.divf %284, %285 : vector<8x128xf32>
    %287 = math.tanh %281 : vector<8x128xf32>
    %288 = vector.extract_strided_slice %286 {offsets = [0, 0], sizes = [8, 32], strides = [1, 1]} : vector<8x128xf32> to vector<8x32xf32>
    %289 = vector.extract_strided_slice %286 {offsets = [0, 32], sizes = [8, 32], strides = [1, 1]} : vector<8x128xf32> to vector<8x32xf32>
    %290 = vector.extract_strided_slice %287 {offsets = [0, 64], sizes = [8, 32], strides = [1, 1]} : vector<8x128xf32> to vector<8x32xf32>
    %291 = vector.extract_strided_slice %286 {offsets = [0, 96], sizes = [8, 32], strides = [1, 1]} : vector<8x128xf32> to vector<8x32xf32>
    %292 = arith.mulf %289, %249 : vector<8x32xf32>
    %293 = arith.mulf %288, %290 : vector<8x32xf32>
    %294 = arith.addf %292, %293 : vector<8x32xf32>
    %295 = math.tanh %294 : vector<8x32xf32>
    %296 = arith.mulf %291, %295 : vector<8x32xf32>
    %297 = vector.broadcast %259 : vector<8x1xf32> to vector<8x32xf32>
    %298 = arith.mulf %297, %296 : vector<8x32xf32>
    %cst_70 = arith.constant 1.000000e+00 : f32
    %299 = vector.broadcast %cst_70 : f32 to vector<8x1xf32>
    %300 = arith.subf %299, %259 : vector<8x1xf32>
    %301 = vector.broadcast %300 : vector<8x1xf32> to vector<8x32xf32>
    %302 = arith.mulf %301, %242 : vector<8x32xf32>
    %303 = arith.addf %298, %302 : vector<8x32xf32>
    %304 = vector.broadcast %259 : vector<8x1xf32> to vector<8x32xf32>
    %305 = arith.mulf %304, %294 : vector<8x32xf32>
    %cst_71 = arith.constant 1.000000e+00 : f32
    %306 = vector.broadcast %cst_71 : f32 to vector<8x1xf32>
    %307 = arith.subf %306, %259 : vector<8x1xf32>
    %308 = vector.broadcast %307 : vector<8x1xf32> to vector<8x32xf32>
    %309 = arith.mulf %308, %249 : vector<8x32xf32>
    %310 = arith.addf %305, %309 : vector<8x32xf32>
    %311 = arith.index_cast %c4_i32 : i32 to index
    %c0_72 = arith.constant 0 : index
    %c0_73 = arith.constant 0 : index
    %312 = vector.load %arg7[%311, %c0_72, %c0_73] : memref<8x8x32xf32, #tpu.memory_space<vmem>>, vector<1x8x32xf32>
    %313 = vector.shape_cast %312 : vector<1x8x32xf32> to vector<8x32xf32>
    %314 = vector.shape_cast %277 : vector<8x32xf32> to vector<1x8x32xf32>
    tpu.vector_store %arg7[%311, %c0_72, %c0_73], %314 {strides = array<i32>} : memref<8x8x32xf32, #tpu.memory_space<vmem>>, vector<1x8x32xf32>,
    %c5_i32 = arith.constant 5 : i32
    %315 = arith.index_cast %c5_i32 : i32 to index
    %c0_74 = arith.constant 0 : index
    %c0_75 = arith.constant 0 : index
    %316 = vector.load %arg2[%315, %c0_74, %c0_75] : memref<8x8x128xf32, #tpu.memory_space<vmem>>, vector<1x8x128xf32>
    %317 = vector.shape_cast %316 : vector<1x8x128xf32> to vector<8x128xf32>
    %318 = arith.index_cast %c5_i32 : i32 to index
    %c0_76 = arith.constant 0 : index
    %c0_77 = arith.constant 0 : index
    %319 = vector.load %arg3[%318, %c0_76, %c0_77] : memref<8x8x1xf32, #tpu.memory_space<vmem>>, vector<1x8x1xf32>
    %320 = vector.shape_cast %319 : vector<1x8x1xf32> to vector<8x1xf32>
    %321 = tpu.concatenate %303, %277 in 1 : vector<8x32xf32>, vector<8x32xf32> -> vector<8x64xf32>
    %cst_78 = arith.constant dense<0.000000e+00> : vector<8x128xf32>
    %322 = tpu.matmul %321, %3, %cst_78 {dimension_numbers = #tpu.dot_dimension_numbers<[1], [0], [0], [1], [0, 0, 1, 1], [], []>} : vector<8x64xf32>, vector<64x128xf32>, vector<8x128xf32> -> vector<8x128xf32>
    %323 = arith.addf %317, %322 : vector<8x128xf32>
    %324 = arith.negf %323 : vector<8x128xf32>
    %325 = math.exp %324 : vector<8x128xf32>
    %cst_79 = arith.constant 1.000000e+00 : f32
    %326 = vector.broadcast %cst_79 : f32 to vector<8x128xf32>
    %327 = arith.addf %326, %325 : vector<8x128xf32>
    %328 = arith.divf %326, %327 : vector<8x128xf32>
    %329 = math.tanh %323 : vector<8x128xf32>
    %330 = vector.extract_strided_slice %328 {offsets = [0, 0], sizes = [8, 32], strides = [1, 1]} : vector<8x128xf32> to vector<8x32xf32>
    %331 = vector.extract_strided_slice %328 {offsets = [0, 32], sizes = [8, 32], strides = [1, 1]} : vector<8x128xf32> to vector<8x32xf32>
    %332 = vector.extract_strided_slice %329 {offsets = [0, 64], sizes = [8, 32], strides = [1, 1]} : vector<8x128xf32> to vector<8x32xf32>
    %333 = vector.extract_strided_slice %328 {offsets = [0, 96], sizes = [8, 32], strides = [1, 1]} : vector<8x128xf32> to vector<8x32xf32>
    %334 = arith.mulf %331, %275 : vector<8x32xf32>
    %335 = arith.mulf %330, %332 : vector<8x32xf32>
    %336 = arith.addf %334, %335 : vector<8x32xf32>
    %337 = math.tanh %336 : vector<8x32xf32>
    %338 = arith.mulf %333, %337 : vector<8x32xf32>
    %339 = tpu.concatenate %338, %303 in 1 : vector<8x32xf32>, vector<8x32xf32> -> vector<8x64xf32>
    %cst_80 = arith.constant dense<0.000000e+00> : vector<8x128xf32>
    %340 = tpu.matmul %339, %4, %cst_80 {dimension_numbers = #tpu.dot_dimension_numbers<[1], [0], [0], [1], [0, 0, 1, 1], [], []>} : vector<8x64xf32>, vector<64x128xf32>, vector<8x128xf32> -> vector<8x128xf32>
    %341 = vector.broadcast %5 : vector<1x128xf32> to vector<8x128xf32>
    %342 = arith.addf %340, %341 : vector<8x128xf32>
    %343 = arith.negf %342 : vector<8x128xf32>
    %344 = math.exp %343 : vector<8x128xf32>
    %cst_81 = arith.constant 1.000000e+00 : f32
    %345 = vector.broadcast %cst_81 : f32 to vector<8x128xf32>
    %346 = arith.addf %345, %344 : vector<8x128xf32>
    %347 = arith.divf %345, %346 : vector<8x128xf32>
    %348 = math.tanh %342 : vector<8x128xf32>
    %349 = vector.extract_strided_slice %347 {offsets = [0, 0], sizes = [8, 32], strides = [1, 1]} : vector<8x128xf32> to vector<8x32xf32>
    %350 = vector.extract_strided_slice %347 {offsets = [0, 32], sizes = [8, 32], strides = [1, 1]} : vector<8x128xf32> to vector<8x32xf32>
    %351 = vector.extract_strided_slice %348 {offsets = [0, 64], sizes = [8, 32], strides = [1, 1]} : vector<8x128xf32> to vector<8x32xf32>
    %352 = vector.extract_strided_slice %347 {offsets = [0, 96], sizes = [8, 32], strides = [1, 1]} : vector<8x128xf32> to vector<8x32xf32>
    %353 = arith.mulf %350, %310 : vector<8x32xf32>
    %354 = arith.mulf %349, %351 : vector<8x32xf32>
    %355 = arith.addf %353, %354 : vector<8x32xf32>
    %356 = math.tanh %355 : vector<8x32xf32>
    %357 = arith.mulf %352, %356 : vector<8x32xf32>
    %358 = vector.broadcast %320 : vector<8x1xf32> to vector<8x32xf32>
    %359 = arith.mulf %358, %357 : vector<8x32xf32>
    %cst_82 = arith.constant 1.000000e+00 : f32
    %360 = vector.broadcast %cst_82 : f32 to vector<8x1xf32>
    %361 = arith.subf %360, %320 : vector<8x1xf32>
    %362 = vector.broadcast %361 : vector<8x1xf32> to vector<8x32xf32>
    %363 = arith.mulf %362, %303 : vector<8x32xf32>
    %364 = arith.addf %359, %363 : vector<8x32xf32>
    %365 = vector.broadcast %320 : vector<8x1xf32> to vector<8x32xf32>
    %366 = arith.mulf %365, %355 : vector<8x32xf32>
    %cst_83 = arith.constant 1.000000e+00 : f32
    %367 = vector.broadcast %cst_83 : f32 to vector<8x1xf32>
    %368 = arith.subf %367, %320 : vector<8x1xf32>
    %369 = vector.broadcast %368 : vector<8x1xf32> to vector<8x32xf32>
    %370 = arith.mulf %369, %310 : vector<8x32xf32>
    %371 = arith.addf %366, %370 : vector<8x32xf32>
    %372 = arith.index_cast %c5_i32 : i32 to index
    %c0_84 = arith.constant 0 : index
    %c0_85 = arith.constant 0 : index
    %373 = vector.load %arg7[%372, %c0_84, %c0_85] : memref<8x8x32xf32, #tpu.memory_space<vmem>>, vector<1x8x32xf32>
    %374 = vector.shape_cast %373 : vector<1x8x32xf32> to vector<8x32xf32>
    %375 = vector.shape_cast %338 : vector<8x32xf32> to vector<1x8x32xf32>
    tpu.vector_store %arg7[%372, %c0_84, %c0_85], %375 {strides = array<i32>} : memref<8x8x32xf32, #tpu.memory_space<vmem>>, vector<1x8x32xf32>,
    %c6_i32 = arith.constant 6 : i32
    %376 = arith.index_cast %c6_i32 : i32 to index
    %c0_86 = arith.constant 0 : index
    %c0_87 = arith.constant 0 : index
    %377 = vector.load %arg2[%376, %c0_86, %c0_87] : memref<8x8x128xf32, #tpu.memory_space<vmem>>, vector<1x8x128xf32>
    %378 = vector.shape_cast %377 : vector<1x8x128xf32> to vector<8x128xf32>
    %379 = arith.index_cast %c6_i32 : i32 to index
    %c0_88 = arith.constant 0 : index
    %c0_89 = arith.constant 0 : index
    %380 = vector.load %arg3[%379, %c0_88, %c0_89] : memref<8x8x1xf32, #tpu.memory_space<vmem>>, vector<1x8x1xf32>
    %381 = vector.shape_cast %380 : vector<1x8x1xf32> to vector<8x1xf32>
    %382 = tpu.concatenate %364, %338 in 1 : vector<8x32xf32>, vector<8x32xf32> -> vector<8x64xf32>
    %cst_90 = arith.constant dense<0.000000e+00> : vector<8x128xf32>
    %383 = tpu.matmul %382, %3, %cst_90 {dimension_numbers = #tpu.dot_dimension_numbers<[1], [0], [0], [1], [0, 0, 1, 1], [], []>} : vector<8x64xf32>, vector<64x128xf32>, vector<8x128xf32> -> vector<8x128xf32>
    %384 = arith.addf %378, %383 : vector<8x128xf32>
    %385 = arith.negf %384 : vector<8x128xf32>
    %386 = math.exp %385 : vector<8x128xf32>
    %cst_91 = arith.constant 1.000000e+00 : f32
    %387 = vector.broadcast %cst_91 : f32 to vector<8x128xf32>
    %388 = arith.addf %387, %386 : vector<8x128xf32>
    %389 = arith.divf %387, %388 : vector<8x128xf32>
    %390 = math.tanh %384 : vector<8x128xf32>
    %391 = vector.extract_strided_slice %389 {offsets = [0, 0], sizes = [8, 32], strides = [1, 1]} : vector<8x128xf32> to vector<8x32xf32>
    %392 = vector.extract_strided_slice %389 {offsets = [0, 32], sizes = [8, 32], strides = [1, 1]} : vector<8x128xf32> to vector<8x32xf32>
    %393 = vector.extract_strided_slice %390 {offsets = [0, 64], sizes = [8, 32], strides = [1, 1]} : vector<8x128xf32> to vector<8x32xf32>
    %394 = vector.extract_strided_slice %389 {offsets = [0, 96], sizes = [8, 32], strides = [1, 1]} : vector<8x128xf32> to vector<8x32xf32>
    %395 = arith.mulf %392, %336 : vector<8x32xf32>
    %396 = arith.mulf %391, %393 : vector<8x32xf32>
    %397 = arith.addf %395, %396 : vector<8x32xf32>
    %398 = math.tanh %397 : vector<8x32xf32>
    %399 = arith.mulf %394, %398 : vector<8x32xf32>
    %400 = tpu.concatenate %399, %364 in 1 : vector<8x32xf32>, vector<8x32xf32> -> vector<8x64xf32>
    %cst_92 = arith.constant dense<0.000000e+00> : vector<8x128xf32>
    %401 = tpu.matmul %400, %4, %cst_92 {dimension_numbers = #tpu.dot_dimension_numbers<[1], [0], [0], [1], [0, 0, 1, 1], [], []>} : vector<8x64xf32>, vector<64x128xf32>, vector<8x128xf32> -> vector<8x128xf32>
    %402 = vector.broadcast %5 : vector<1x128xf32> to vector<8x128xf32>
    %403 = arith.addf %401, %402 : vector<8x128xf32>
    %404 = arith.negf %403 : vector<8x128xf32>
    %405 = math.exp %404 : vector<8x128xf32>
    %cst_93 = arith.constant 1.000000e+00 : f32
    %406 = vector.broadcast %cst_93 : f32 to vector<8x128xf32>
    %407 = arith.addf %406, %405 : vector<8x128xf32>
    %408 = arith.divf %406, %407 : vector<8x128xf32>
    %409 = math.tanh %403 : vector<8x128xf32>
    %410 = vector.extract_strided_slice %408 {offsets = [0, 0], sizes = [8, 32], strides = [1, 1]} : vector<8x128xf32> to vector<8x32xf32>
    %411 = vector.extract_strided_slice %408 {offsets = [0, 32], sizes = [8, 32], strides = [1, 1]} : vector<8x128xf32> to vector<8x32xf32>
    %412 = vector.extract_strided_slice %409 {offsets = [0, 64], sizes = [8, 32], strides = [1, 1]} : vector<8x128xf32> to vector<8x32xf32>
    %413 = vector.extract_strided_slice %408 {offsets = [0, 96], sizes = [8, 32], strides = [1, 1]} : vector<8x128xf32> to vector<8x32xf32>
    %414 = arith.mulf %411, %371 : vector<8x32xf32>
    %415 = arith.mulf %410, %412 : vector<8x32xf32>
    %416 = arith.addf %414, %415 : vector<8x32xf32>
    %417 = math.tanh %416 : vector<8x32xf32>
    %418 = arith.mulf %413, %417 : vector<8x32xf32>
    %419 = vector.broadcast %381 : vector<8x1xf32> to vector<8x32xf32>
    %420 = arith.mulf %419, %418 : vector<8x32xf32>
    %cst_94 = arith.constant 1.000000e+00 : f32
    %421 = vector.broadcast %cst_94 : f32 to vector<8x1xf32>
    %422 = arith.subf %421, %381 : vector<8x1xf32>
    %423 = vector.broadcast %422 : vector<8x1xf32> to vector<8x32xf32>
    %424 = arith.mulf %423, %364 : vector<8x32xf32>
    %425 = arith.addf %420, %424 : vector<8x32xf32>
    %426 = vector.broadcast %381 : vector<8x1xf32> to vector<8x32xf32>
    %427 = arith.mulf %426, %416 : vector<8x32xf32>
    %cst_95 = arith.constant 1.000000e+00 : f32
    %428 = vector.broadcast %cst_95 : f32 to vector<8x1xf32>
    %429 = arith.subf %428, %381 : vector<8x1xf32>
    %430 = vector.broadcast %429 : vector<8x1xf32> to vector<8x32xf32>
    %431 = arith.mulf %430, %371 : vector<8x32xf32>
    %432 = arith.addf %427, %431 : vector<8x32xf32>
    %433 = arith.index_cast %c6_i32 : i32 to index
    %c0_96 = arith.constant 0 : index
    %c0_97 = arith.constant 0 : index
    %434 = vector.load %arg7[%433, %c0_96, %c0_97] : memref<8x8x32xf32, #tpu.memory_space<vmem>>, vector<1x8x32xf32>
    %435 = vector.shape_cast %434 : vector<1x8x32xf32> to vector<8x32xf32>
    %436 = vector.shape_cast %399 : vector<8x32xf32> to vector<1x8x32xf32>
    tpu.vector_store %arg7[%433, %c0_96, %c0_97], %436 {strides = array<i32>} : memref<8x8x32xf32, #tpu.memory_space<vmem>>, vector<1x8x32xf32>,
    %c7_i32 = arith.constant 7 : i32
    %437 = arith.index_cast %c7_i32 : i32 to index
    %c0_98 = arith.constant 0 : index
    %c0_99 = arith.constant 0 : index
    %438 = vector.load %arg2[%437, %c0_98, %c0_99] : memref<8x8x128xf32, #tpu.memory_space<vmem>>, vector<1x8x128xf32>
    %439 = vector.shape_cast %438 : vector<1x8x128xf32> to vector<8x128xf32>
    %440 = arith.index_cast %c7_i32 : i32 to index
    %c0_100 = arith.constant 0 : index
    %c0_101 = arith.constant 0 : index
    %441 = vector.load %arg3[%440, %c0_100, %c0_101] : memref<8x8x1xf32, #tpu.memory_space<vmem>>, vector<1x8x1xf32>
    %442 = vector.shape_cast %441 : vector<1x8x1xf32> to vector<8x1xf32>
    %443 = tpu.concatenate %425, %399 in 1 : vector<8x32xf32>, vector<8x32xf32> -> vector<8x64xf32>
    %cst_102 = arith.constant dense<0.000000e+00> : vector<8x128xf32>
    %444 = tpu.matmul %443, %3, %cst_102 {dimension_numbers = #tpu.dot_dimension_numbers<[1], [0], [0], [1], [0, 0, 1, 1], [], []>} : vector<8x64xf32>, vector<64x128xf32>, vector<8x128xf32> -> vector<8x128xf32>
    %445 = arith.addf %439, %444 : vector<8x128xf32>
    %446 = arith.negf %445 : vector<8x128xf32>
    %447 = math.exp %446 : vector<8x128xf32>
    %cst_103 = arith.constant 1.000000e+00 : f32
    %448 = vector.broadcast %cst_103 : f32 to vector<8x128xf32>
    %449 = arith.addf %448, %447 : vector<8x128xf32>
    %450 = arith.divf %448, %449 : vector<8x128xf32>
    %451 = math.tanh %445 : vector<8x128xf32>
    %452 = vector.extract_strided_slice %450 {offsets = [0, 0], sizes = [8, 32], strides = [1, 1]} : vector<8x128xf32> to vector<8x32xf32>
    %453 = vector.extract_strided_slice %450 {offsets = [0, 32], sizes = [8, 32], strides = [1, 1]} : vector<8x128xf32> to vector<8x32xf32>
    %454 = vector.extract_strided_slice %451 {offsets = [0, 64], sizes = [8, 32], strides = [1, 1]} : vector<8x128xf32> to vector<8x32xf32>
    %455 = vector.extract_strided_slice %450 {offsets = [0, 96], sizes = [8, 32], strides = [1, 1]} : vector<8x128xf32> to vector<8x32xf32>
    %456 = arith.mulf %453, %397 : vector<8x32xf32>
    %457 = arith.mulf %452, %454 : vector<8x32xf32>
    %458 = arith.addf %456, %457 : vector<8x32xf32>
    %459 = math.tanh %458 : vector<8x32xf32>
    %460 = arith.mulf %455, %459 : vector<8x32xf32>
    %461 = tpu.concatenate %460, %425 in 1 : vector<8x32xf32>, vector<8x32xf32> -> vector<8x64xf32>
    %cst_104 = arith.constant dense<0.000000e+00> : vector<8x128xf32>
    %462 = tpu.matmul %461, %4, %cst_104 {dimension_numbers = #tpu.dot_dimension_numbers<[1], [0], [0], [1], [0, 0, 1, 1], [], []>} : vector<8x64xf32>, vector<64x128xf32>, vector<8x128xf32> -> vector<8x128xf32>
    %463 = vector.broadcast %5 : vector<1x128xf32> to vector<8x128xf32>
    %464 = arith.addf %462, %463 : vector<8x128xf32>
    %465 = arith.negf %464 : vector<8x128xf32>
    %466 = math.exp %465 : vector<8x128xf32>
    %cst_105 = arith.constant 1.000000e+00 : f32
    %467 = vector.broadcast %cst_105 : f32 to vector<8x128xf32>
    %468 = arith.addf %467, %466 : vector<8x128xf32>
    %469 = arith.divf %467, %468 : vector<8x128xf32>
    %470 = math.tanh %464 : vector<8x128xf32>
    %471 = vector.extract_strided_slice %469 {offsets = [0, 0], sizes = [8, 32], strides = [1, 1]} : vector<8x128xf32> to vector<8x32xf32>
    %472 = vector.extract_strided_slice %469 {offsets = [0, 32], sizes = [8, 32], strides = [1, 1]} : vector<8x128xf32> to vector<8x32xf32>
    %473 = vector.extract_strided_slice %470 {offsets = [0, 64], sizes = [8, 32], strides = [1, 1]} : vector<8x128xf32> to vector<8x32xf32>
    %474 = vector.extract_strided_slice %469 {offsets = [0, 96], sizes = [8, 32], strides = [1, 1]} : vector<8x128xf32> to vector<8x32xf32>
    %475 = arith.mulf %472, %432 : vector<8x32xf32>
    %476 = arith.mulf %471, %473 : vector<8x32xf32>
    %477 = arith.addf %475, %476 : vector<8x32xf32>
    %478 = math.tanh %477 : vector<8x32xf32>
    %479 = arith.mulf %474, %478 : vector<8x32xf32>
    %480 = vector.broadcast %442 : vector<8x1xf32> to vector<8x32xf32>
    %481 = arith.mulf %480, %479 : vector<8x32xf32>
    %cst_106 = arith.constant 1.000000e+00 : f32
    %482 = vector.broadcast %cst_106 : f32 to vector<8x1xf32>
    %483 = arith.subf %482, %442 : vector<8x1xf32>
    %484 = vector.broadcast %483 : vector<8x1xf32> to vector<8x32xf32>
    %485 = arith.mulf %484, %425 : vector<8x32xf32>
    %486 = arith.addf %481, %485 : vector<8x32xf32>
    %487 = vector.broadcast %442 : vector<8x1xf32> to vector<8x32xf32>
    %488 = arith.mulf %487, %477 : vector<8x32xf32>
    %cst_107 = arith.constant 1.000000e+00 : f32
    %489 = vector.broadcast %cst_107 : f32 to vector<8x1xf32>
    %490 = arith.subf %489, %442 : vector<8x1xf32>
    %491 = vector.broadcast %490 : vector<8x1xf32> to vector<8x32xf32>
    %492 = arith.mulf %491, %432 : vector<8x32xf32>
    %493 = arith.addf %488, %492 : vector<8x32xf32>
    %494 = arith.index_cast %c7_i32 : i32 to index
    %c0_108 = arith.constant 0 : index
    %c0_109 = arith.constant 0 : index
    %495 = vector.load %arg7[%494, %c0_108, %c0_109] : memref<8x8x32xf32, #tpu.memory_space<vmem>>, vector<1x8x32xf32>
    %496 = vector.shape_cast %495 : vector<1x8x32xf32> to vector<8x32xf32>
    %497 = vector.shape_cast %460 : vector<8x32xf32> to vector<1x8x32xf32>
    tpu.vector_store %arg7[%494, %c0_108, %c0_109], %497 {strides = array<i32>} : memref<8x8x32xf32, #tpu.memory_space<vmem>>, vector<1x8x32xf32>,
    %c8_i32 = arith.constant 8 : i32
    %c0_110 = arith.constant 0 : index
    %c0_111 = arith.constant 0 : index
    %498 = vector.load %arg8[%c0_110, %c0_111] : memref<8x32xf32, #tpu.memory_space<vmem>>, vector<8x32xf32>
    tpu.vector_store %arg8[%c0_110, %c0_111], %460 {strides = array<i32>} : memref<8x32xf32, #tpu.memory_space<vmem>>, vector<8x32xf32>,
    %c0_112 = arith.constant 0 : index
    %c0_113 = arith.constant 0 : index
    %499 = vector.load %arg9[%c0_112, %c0_113] : memref<8x32xf32, #tpu.memory_space<vmem>>, vector<8x32xf32>
    tpu.vector_store %arg9[%c0_112, %c0_113], %458 {strides = array<i32>} : memref<8x32xf32, #tpu.memory_space<vmem>>, vector<8x32xf32>,
    %c0_114 = arith.constant 0 : index
    %c0_115 = arith.constant 0 : index
    %500 = vector.load %arg10[%c0_114, %c0_115] : memref<8x32xf32, #tpu.memory_space<vmem>>, vector<8x32xf32>
    tpu.vector_store %arg10[%c0_114, %c0_115], %486 {strides = array<i32>} : memref<8x32xf32, #tpu.memory_space<vmem>>, vector<8x32xf32>,
    %c0_116 = arith.constant 0 : index
    %c0_117 = arith.constant 0 : index
    %501 = vector.load %arg11[%c0_116, %c0_117] : memref<8x32xf32, #tpu.memory_space<vmem>>, vector<8x32xf32>
    tpu.vector_store %arg11[%c0_116, %c0_117], %493 {strides = array<i32>} : memref<8x32xf32, #tpu.memory_space<vmem>>, vector<8x32xf32>,
    return
  }
  func.func @transform_0(%arg0: i32, %arg1: i32) -> (i32, i32, i32) {
    %c0_i32 = arith.constant 0 : i32
    %c0_i32_0 = arith.constant 0 : i32
    return %arg1, %arg0, %c0_i32 : i32, i32, i32
  }
  func.func @transform_1(%arg0: i32, %arg1: i32) -> (i32, i32, i32) {
    %c0_i32 = arith.constant 0 : i32
    %c0_i32_0 = arith.constant 0 : i32
    return %arg1, %arg0, %c0_i32 : i32, i32, i32
  }
  func.func @transform_2(%arg0: i32, %arg1: i32) -> (i32, i32) {
    %c0_i32 = arith.constant 0 : i32
    %c0_i32_0 = arith.constant 0 : i32
    %c0_i32_1 = arith.constant 0 : i32
    return %c0_i32, %c0_i32_0 : i32, i32
  }
  func.func @transform_3(%arg0: i32, %arg1: i32) -> (i32, i32) {
    %c0_i32 = arith.constant 0 : i32
    %c0_i32_0 = arith.constant 0 : i32
    %c0_i32_1 = arith.constant 0 : i32
    return %c0_i32, %c0_i32_0 : i32, i32
  }
  func.func @transform_4(%arg0: i32, %arg1: i32) -> (i32, i32) {
    %c0_i32 = arith.constant 0 : i32
    %c0_i32_0 = arith.constant 0 : i32
    %c0_i32_1 = arith.constant 0 : i32
    return %c0_i32, %c0_i32_0 : i32, i32
  }
  func.func @transform_5(%arg0: i32, %arg1: i32) -> (i32, i32, i32) {
    %c0_i32 = arith.constant 0 : i32
    %c0_i32_0 = arith.constant 0 : i32
    return %arg1, %arg0, %c0_i32 : i32, i32, i32
  }
  func.func @transform_6(%arg0: i32, %arg1: i32) -> (i32, i32) {
    %c0_i32 = arith.constant 0 : i32
    %c0_i32_0 = arith.constant 0 : i32
    return %arg0, %c0_i32 : i32, i32
  }
  func.func @transform_7(%arg0: i32, %arg1: i32) -> (i32, i32) {
    %c0_i32 = arith.constant 0 : i32
    %c0_i32_0 = arith.constant 0 : i32
    return %arg0, %c0_i32 : i32, i32
  }
  func.func @transform_8(%arg0: i32, %arg1: i32) -> (i32, i32) {
    %c0_i32 = arith.constant 0 : i32
    %c0_i32_0 = arith.constant 0 : i32
    return %arg0, %c0_i32 : i32, i32
  }
  func.func @transform_9(%arg0: i32, %arg1: i32) -> (i32, i32) {
    %c0_i32 = arith.constant 0 : i32
    %c0_i32_0 = arith.constant 0 : i32
    return %arg0, %c0_i32 : i32, i32
  }
}

</mosaic_0001>

<llo_original>
// kernel: hrnn_forward.1
$region0: #{hrnn_forward.1}
  #allocation0 [shape = 'u32[]', space=smem, size = 0x4, offset = 0x4, fixed_abs, tag = 'smem constant byte address 0x4 - core index']
  #allocation1 [shape = 'u32[144,128]{1,0:T(1,128)}', space=vmem, size = 0x12000, scoped, tag = 'internal scratch']
  %s0 = inlined_call_operand.vmem [shape: f32[8,8,128], index: 0, kind: input, shape index: {}]
  %s1 = inlined_call_operand.vmem [shape: f32[8,8,1], index: 1, kind: input, shape index: {}]
  %s2 = inlined_call_operand.vmem [shape: f32[64,128], index: 2, kind: input, shape index: {}]
  %s3 = inlined_call_operand.vmem [shape: f32[64,128], index: 3, kind: input, shape index: {}]
  %s4 = inlined_call_operand.vmem [shape: f32[1,128], index: 4, kind: input, shape index: {}]
  %s5 = inlined_call_operand.vmem [shape: f32[8,8,32], index: 5, kind: output, shape index: {0}]
  %s6 = inlined_call_operand.hbm [shape: f32[8,32], index: 6, kind: output, shape index: {1}]
  %s7 = inlined_call_operand.hbm [shape: f32[8,32], index: 7, kind: output, shape index: {2}]
  %s8 = inlined_call_operand.hbm [shape: f32[8,32], index: 8, kind: output, shape index: {3}]
  %s9 = inlined_call_operand.hbm [shape: f32[8,32], index: 9, kind: output, shape index: {4}]
  %10 = xla_tuple %s5, %s6, %s7, %s8, %s9
  %s11 = sld [smem:[#allocation0]]
  $region66: #{hrnn_forward.1} parent=0
    _
  %s13 = ssub.s32 1, %s11
  %s14 = scalar_select 0, %s13, %s11
  $region1: #{hrnn_forward.1} parent=0
    #allocation2 [shape = 'u8[4096]{0}', space=vmem, size = 0x1000, scoped, tag = 'output window, operand 1, single buffered']
    #allocation3 [shape = 's32[1]{0}', space=sflag, size = 0x4, scoped, tag = 'scoped memory for hrnn_forward.1']
    #allocation4 [shape = 'u8[4096]{0}', space=vmem, size = 0x1000, scoped, tag = 'output window, operand 2, single buffered']
    #allocation5 [shape = 's32[1]{0}', space=sflag, size = 0x4, scoped, tag = 'scoped memory for hrnn_forward.1']
    #allocation6 [shape = 'u8[4096]{0}', space=vmem, size = 0x1000, scoped, tag = 'output window, operand 3, single buffered']
    #allocation7 [shape = 'u8[4096]{0}', space=vmem, size = 0x1000, scoped, tag = 'output window, operand 4, single buffered']
    #allocation8 [shape = 's32[1]{0}', space=sflag, size = 0x4, scoped, tag = 'scoped memory for hrnn_forward.1']
    %15 = vsyncpa [#allocation3], 0
    %16 = vsyncpa [#allocation5], 0
    %17 = vsyncpa [#allocation8], 0
    // Predicated region
    $region2: #{hrnn_forward.1} parent=1 // pred_check
      _
    $region3: #{hrnn_forward.1} parent=1 // pred_check_branch
      %19 = sbr.rel (0) target = $region5
    $region4: #{hrnn_forward.1} parent=1 // pred_region
      _
    $region5: #{hrnn_forward.1} parent=1 // pred_fallthru
      _
    // Predicated region
    $region6: #{hrnn_forward.1} parent=1 // pred_check
      _
    $region7: #{hrnn_forward.1} parent=1 // pred_check_branch
      %21 = sbr.rel (0) target = $region9
    $region8: #{hrnn_forward.1} parent=1 // pred_region
      _
    $region9: #{hrnn_forward.1} parent=1 // pred_fallthru
      _
    // Predicated region
    $region10: #{hrnn_forward.1} parent=1 // pred_check
      _
    $region11: #{hrnn_forward.1} parent=1 // pred_check_branch
      %23 = sbr.rel (0) target = $region13
    $region12: #{hrnn_forward.1} parent=1 // pred_region
      _
    $region13: #{hrnn_forward.1} parent=1 // pred_fallthru
      _
    // Predicated region
    $region14: #{hrnn_forward.1} parent=1 // pred_check
      _
    $region15: #{hrnn_forward.1} parent=1 // pred_check_branch
      %25 = sbr.rel (0) target = $region17
    $region16: #{hrnn_forward.1} parent=1 // pred_region
      _
    $region17: #{hrnn_forward.1} parent=1 // pred_fallthru
      _
    // Predicated region
    $region18: #{hrnn_forward.1} parent=1 // pred_check
      _
    $region19: #{hrnn_forward.1} parent=1 // pred_check_branch
      %27 = sbr.rel (0) target = $region21
    $region20: #{hrnn_forward.1} parent=1 // pred_region
      _
    $region21: #{hrnn_forward.1} parent=1 // pred_fallthru
      _
    %p28 = scmp.eq.s32.totalorder 0, 0
    // Predicated region
    $region22: #{hrnn_forward.1} parent=1 // pred_check
      %p29 = pneg %p28
    $region23: #{hrnn_forward.1} parent=1 // pred_check_branch
      %31 = sbr.rel (%p29) target = $region25
    $region24: #{hrnn_forward.1} parent=1 // pred_region
      %vm32 = vcmask 261120
      %33 = vst.msk [vmem:[#allocation2] sm:$0xff] %vm32, 0.0
      %34 = vst.msk [vmem:[#allocation4] sm:$0xff] %vm32, 0.0
      %35 = vst.msk [vmem:[#allocation6] sm:$0xff] %vm32, 0.0
      %36 = vst.msk [vmem:[#allocation7] sm:$0xff] %vm32, 0.0
    $region25: #{hrnn_forward.1} parent=1 // pred_fallthru
      _
    %v37 = vld [vmem:[%s2] sm:$0xff]
    %v38 = vld [vmem:[%s2 + $0x8] sm:$0xff]
    %v39 = vld [vmem:[%s2 + $0x10] sm:$0xff]
    %v40 = vld [vmem:[%s2 + $0x18] sm:$0xff]
    %v41 = vld [vmem:[%s2 + $0x20] sm:$0xff]
    %v42 = vld [vmem:[%s2 + $0x28] sm:$0xff]
    %v43 = vld [vmem:[%s2 + $0x30] sm:$0xff]
    %v44 = vld [vmem:[%s2 + $0x38] sm:$0xff]
    %v45 = vld [vmem:[%s3] sm:$0xff]
    %v46 = vld [vmem:[%s3 + $0x8] sm:$0xff]
    %v47 = vld [vmem:[%s3 + $0x10] sm:$0xff]
    %v48 = vld [vmem:[%s3 + $0x18] sm:$0xff]
    %v49 = vld [vmem:[%s3 + $0x20] sm:$0xff]
    %v50 = vld [vmem:[%s3 + $0x28] sm:$0xff]
    %v51 = vld [vmem:[%s3 + $0x30] sm:$0xff]
    %v52 = vld [vmem:[%s3 + $0x38] sm:$0xff]
    %v53 = vld [vmem:[%s4] sm:$0x1]
    %v54 = vld [vmem:[#allocation2] sm:$0xff]
    %v55 = vld [vmem:[#allocation4] sm:$0xff]
    %v56 = vld [vmem:[#allocation6] sm:$0xff]
    %v57 = vld [vmem:[#allocation7] sm:$0xff]
    %v58 = vld [vmem:[%s0] sm:$0xff]
    %v59 = vld [vmem:[%s1] sm:$0xff]
    %61 = vrot.lane.b32.xlu0 %v54, 32
    %v62 = vpop.permute.xlu0 %61
    %vm64 = vcmask 261120
    %v65 = vsel %vm64, %v56, %v62
    %vm66 = vcmask 523264
    %v68 = vsel %vm66, %v65, 0
    %70 = vmatprep.subr.mxu0 0.0
    %71 = vmatpush1.msra.mxu0 %v37
    %72 = vmatprep.subr.mxu0 0.0
    %73 = vmatpush1.msra.mxu0 %v38
    %74 = vmatprep.subr.mxu0 0.0
    %75 = vmatpush1.msra.mxu0 %v39
    %76 = vmatprep.subr.mxu0 0.0
    %77 = vmatpush1.msra.mxu0 %v40
    %78 = vmatprep.subr.mxu0 0.0
    %79 = vmatpush1.msra.mxu0 %v41
    %80 = vmatprep.subr.mxu0 0.0
    %81 = vmatpush1.msra.mxu0 %v42
    %82 = vmatprep.subr.mxu0 0.0
    %83 = vmatpush1.msra.mxu0 %v43
    %84 = vmatprep.subr.mxu0 0.0
    %85 = vmatpush1.msra.mxu0 %v44
    %86 = vmatprep.subr.mxu0 0.0
    %87 = vmatpush1.msra.mxu0 0.0
    %88 = vmatprep.subr.mxu0 0.0
    %89 = vmatpush1.msra.mxu0 0.0
    %90 = vmatprep.subr.mxu0 0.0
    %91 = vmatpush1.msra.mxu0 0.0
    %92 = vmatprep.subr.mxu0 0.0
    %93 = vmatpush1.msra.mxu0 0.0
    %94 = vmatprep.subr.mxu0 0.0
    %95 = vmatpush1.msra.mxu0 0.0
    %96 = vmatprep.subr.mxu0 0.0
    %97 = vmatpush1.msra.mxu0 0.0
    %98 = vmatprep.subr.mxu0 0.0
    %99 = vmatpush1.msra.mxu0 0.0
    %100 = vmatprep.subr.mxu0 0.0
    %101 = vmatpush1.msra.mxu0 0.0
    %102 = vmatprep.subr.mxu0 0.0
    %103 = vmatpush1.msra.mxu0 0.0
    %104 = vmatprep.subr.mxu0 0.0
    %105 = vmatpush1.msra.mxu0 0.0
    %106 = vmatprep.subr.mxu0 0.0
    %107 = vmatpush1.msra.mxu0 0.0
    %108 = vmatprep.subr.mxu0 0.0
    %109 = vmatpush1.msra.mxu0 0.0
    %110 = vmatprep.subr.mxu0 0.0
    %111 = vmatpush1.msra.mxu0 0.0
    %112 = vmatprep.subr.mxu0 0.0
    %113 = vmatpush1.msra.mxu0 0.0
    %114 = vmatprep.subr.mxu0 0.0
    %115 = vmatpush1.msra.mxu0 0.0
    %116 = vmatprep.subr.mxu0 0.0
    %117 = vmatpush1.msra.mxu0 0.0
    %118 = vmatprep.subr.mxu0 0.0
    %119 = vmatpush1.msra.mxu0 0.0
    %120 = vmatprep.subr.mxu0 0.0
    %121 = vmatpush1.msra.mxu0 0.0
    %122 = vmatprep.subr.mxu0 0.0
    %123 = vmatpush1.msra.mxu0 0.0
    %124 = vmatprep.subr.mxu0 0.0
    %125 = vmatpush1.msra.mxu0 0.0
    %126 = vmatprep.subr.mxu0 0.0
    %127 = vmatpush1.msra.mxu0 0.0
    %128 = vmatprep.subr.mxu0 0.0
    %129 = vmatpush1.msra.mxu0 0.0
    %130 = vmatprep.subr.mxu0 0.0
    %131 = vmatpush1.msra.mxu0 0.0
    %132 = vmatprep.subr.mxu0 0.0
    %133 = vmatpush1.msra.mxu0 0.0
    %134 = vmatprep.mubr.f32.mxu0 0.0
    %135 = vmatmul.mubr.f32.gmra.mrb[0].mxu0 %v68
    %v136 = vpop.f32.mrb[0].mxu0
    %v137 = vadd.f32 0.0, %v136
    %v138 = vpop.f32.mrb[0].mxu0
    %139 = vdwg.mxu0
    %v140 = vadd.f32 %v58, %v137
    %v141 = vxor.u32 %v140, 2147483648
    %v142 = vmul.f32 %v141, 1.442695
    %v143 = vpow.pop %v142
    %v144 = vadd.f32 %v143, 1.0
    %v145 = vrcp.pop %v144
    %v146 = vmul.f32 1.0, %v145
    %v147 = vtanh.pop %v140
    %149 = vrot.lane.b32.xlu0 %v55, 32
    %v150 = vpop.permute.xlu0 %149
    %v152 = vmul.f32 %v146, %v150
    %154 = vrot.lane.b32.xlu0 %v147, 64
    %v155 = vpop.permute.xlu0 %154
    %v157 = vmul.f32 %v146, %v155
    %159 = vrot.lane.b32.xlu0 %v157, 32
    %v160 = vpop.permute.xlu0 %159
    %v162 = vadd.f32 %v152, %v160
    %v163 = vtanh.pop %v162
    %165 = vrot.lane.b32.xlu0 %v163, 64
    %v166 = vpop.permute.xlu0 %165
    %v168 = vmul.f32 %v146, %v166
    %170 = vrot.lane.b32.xlu0 %v168, 32
    %v171 = vpop.permute.xlu0 %170
    %174 = vrot.lane.b32.xlu0 %v56, 32
    %v175 = vpop.permute.xlu0 %174
    %v177 = vsel %vm64, %v171, %v175
    %v179 = vlaneseq
    %v180 = vshrl.u32 %v179, 7
    %v181 = vsub.s32 0, %v180
    %v182 = vrot.slane %v53, %v181
    %v185 = vsel %vm66, %v177, 0
    %187 = vmatprep.subr.mxu0 0.0
    %188 = vmatpush1.msra.mxu0 %v45
    %189 = vmatprep.subr.mxu0 0.0
    %190 = vmatpush1.msra.mxu0 %v46
    %191 = vmatprep.subr.mxu0 0.0
    %192 = vmatpush1.msra.mxu0 %v47
    %193 = vmatprep.subr.mxu0 0.0
    %194 = vmatpush1.msra.mxu0 %v48
    %195 = vmatprep.subr.mxu0 0.0
    %196 = vmatpush1.msra.mxu0 %v49
    %197 = vmatprep.subr.mxu0 0.0
    %198 = vmatpush1.msra.mxu0 %v50
    %199 = vmatprep.subr.mxu0 0.0
    %200 = vmatpush1.msra.mxu0 %v51
    %201 = vmatprep.subr.mxu0 0.0
    %202 = vmatpush1.msra.mxu0 %v52
    %203 = vmatprep.subr.mxu0 0.0
    %204 = vmatpush1.msra.mxu0 0.0
    %205 = vmatprep.subr.mxu0 0.0
    %206 = vmatpush1.msra.mxu0 0.0
    %207 = vmatprep.subr.mxu0 0.0
    %208 = vmatpush1.msra.mxu0 0.0
    %209 = vmatprep.subr.mxu0 0.0
    %210 = vmatpush1.msra.mxu0 0.0
    %211 = vmatprep.subr.mxu0 0.0
    %212 = vmatpush1.msra.mxu0 0.0
    %213 = vmatprep.subr.mxu0 0.0
    %214 = vmatpush1.msra.mxu0 0.0
    %215 = vmatprep.subr.mxu0 0.0
    %216 = vmatpush1.msra.mxu0 0.0
    %217 = vmatprep.subr.mxu0 0.0
    %218 = vmatpush1.msra.mxu0 0.0
    %219 = vmatprep.subr.mxu0 0.0
    %220 = vmatpush1.msra.mxu0 0.0
    %221 = vmatprep.subr.mxu0 0.0
    %222 = vmatpush1.msra.mxu0 0.0
    %223 = vmatprep.subr.mxu0 0.0
    %224 = vmatpush1.msra.mxu0 0.0
    %225 = vmatprep.subr.mxu0 0.0
    %226 = vmatpush1.msra.mxu0 0.0
    %227 = vmatprep.subr.mxu0 0.0
    %228 = vmatpush1.msra.mxu0 0.0
    %229 = vmatprep.subr.mxu0 0.0
    %230 = vmatpush1.msra.mxu0 0.0
    %231 = vmatprep.subr.mxu0 0.0
    %232 = vmatpush1.msra.mxu0 0.0
    %233 = vmatprep.subr.mxu0 0.0
    %234 = vmatpush1.msra.mxu0 0.0
    %235 = vmatprep.subr.mxu0 0.0
    %236 = vmatpush1.msra.mxu0 0.0
    %237 = vmatprep.subr.mxu0 0.0
    %238 = vmatpush1.msra.mxu0 0.0
    %239 = vmatprep.subr.mxu0 0.0
    %240 = vmatpush1.msra.mxu0 0.0
    %241 = vmatprep.subr.mxu0 0.0
    %242 = vmatpush1.msra.mxu0 0.0
    %243 = vmatprep.subr.mxu0 0.0
    %244 = vmatpush1.msra.mxu0 0.0
    %245 = vmatprep.subr.mxu0 0.0
    %246 = vmatpush1.msra.mxu0 0.0
    %247 = vmatprep.subr.mxu0 0.0
    %248 = vmatpush1.msra.mxu0 0.0
    %249 = vmatprep.subr.mxu0 0.0
    %250 = vmatpush1.msra.mxu0 0.0
    %251 = vmatprep.mubr.f32.mxu0 0.0
    %252 = vmatmul.mubr.f32.gmra.mrb[0].mxu0 %v185
    %v253 = vpop.f32.mrb[0].mxu0
    %v254 = vadd.f32 %v182, %v253
    %v255 = vpop.f32.mrb[0].mxu0
    %256 = vdwg.mxu0
    %v257 = vxor.u32 %v254, 2147483648
    %v258 = vmul.f32 %v257, 1.442695
    %v259 = vpow.pop %v258
    %v260 = vadd.f32 %v259, 1.0
    %v261 = vrcp.pop %v260
    %v262 = vmul.f32 1.0, %v261
    %v263 = vtanh.pop %v254
    %265 = vrot.lane.b32.xlu0 %v57, 32
    %v266 = vpop.permute.xlu0 %265
    %v268 = vmul.f32 %v262, %v266
    %270 = vrot.lane.b32.xlu0 %v263, 64
    %v271 = vpop.permute.xlu0 %270
    %v273 = vmul.f32 %v262, %v271
    %275 = vrot.lane.b32.xlu0 %v273, 32
    %v276 = vpop.permute.xlu0 %275
    %v278 = vadd.f32 %v268, %v276
    %v279 = vtanh.pop %v278
    %281 = vrot.lane.b32.xlu0 %v279, 64
    %v282 = vpop.permute.xlu0 %281
    %v284 = vmul.f32 %v262, %v282
    %286 = vset.pattern.permute.xlu0 0
    %287 = vperm.xlu0 %286, %v59
    %v288 = vpop.permute.xlu0 %287
    %v290 = vmul.f32 %v288, %v284
    %v291 = vsub.f32 1.0, %v59
    %293 = vset.pattern.permute.xlu0 0
    %294 = vperm.xlu0 %293, %v291
    %v295 = vpop.permute.xlu0 %294
    %v297 = vmul.f32 %v295, %v56
    %299 = vrot.lane.b32.xlu0 %v297, 96
    %v300 = vpop.permute.xlu0 %299
    %v302 = vadd.f32 %v290, %v300
    %v303 = vmul.f32 %v288, %v278
    %v304 = vmul.f32 %v295, %v57
    %306 = vrot.lane.b32.xlu0 %v304, 32
    %v307 = vpop.permute.xlu0 %306
    %v309 = vadd.f32 %v303, %v307
    %310 = vst.msk [vmem:[%s5] sm:$0xff] %vm64, %v171
    %s311 = scalar_lea.vmem %s0, 8
    %v312 = vld [vmem:[%s311] sm:$0xff]
    %s313 = scalar_lea.vmem %s1, 8
    %v314 = vld [vmem:[%s313] sm:$0xff]
    %316 = vrot.lane.b32.xlu0 %v302, 32
    %v317 = vpop.permute.xlu0 %316
    %319 = vrot.lane.b32.xlu0 %v168, 64
    %v320 = vpop.permute.xlu0 %319
    %v322 = vsel %vm64, %v317, %v320
    %v324 = vsel %vm66, %v322, 0
    %326 = vmatprep.subr.mxu0 0.0
    %327 = vmatpush1.msra.mxu0 %v37
    %328 = vmatprep.subr.mxu0 0.0
    %329 = vmatpush1.msra.mxu0 %v38
    %330 = vmatprep.subr.mxu0 0.0
    %331 = vmatpush1.msra.mxu0 %v39
    %332 = vmatprep.subr.mxu0 0.0
    %333 = vmatpush1.msra.mxu0 %v40
    %334 = vmatprep.subr.mxu0 0.0
    %335 = vmatpush1.msra.mxu0 %v41
    %336 = vmatprep.subr.mxu0 0.0
    %337 = vmatpush1.msra.mxu0 %v42
    %338 = vmatprep.subr.mxu0 0.0
    %339 = vmatpush1.msra.mxu0 %v43
    %340 = vmatprep.subr.mxu0 0.0
    %341 = vmatpush1.msra.mxu0 %v44
    %342 = vmatprep.subr.mxu0 0.0
    %343 = vmatpush1.msra.mxu0 0.0
    %344 = vmatprep.subr.mxu0 0.0
    %345 = vmatpush1.msra.mxu0 0.0
    %346 = vmatprep.subr.mxu0 0.0
    %347 = vmatpush1.msra.mxu0 0.0
    %348 = vmatprep.subr.mxu0 0.0
    %349 = vmatpush1.msra.mxu0 0.0
    %350 = vmatprep.subr.mxu0 0.0
    %351 = vmatpush1.msra.mxu0 0.0
    %352 = vmatprep.subr.mxu0 0.0
    %353 = vmatpush1.msra.mxu0 0.0
    %354 = vmatprep.subr.mxu0 0.0
    %355 = vmatpush1.msra.mxu0 0.0
    %356 = vmatprep.subr.mxu0 0.0
    %357 = vmatpush1.msra.mxu0 0.0
    %358 = vmatprep.subr.mxu0 0.0
    %359 = vmatpush1.msra.mxu0 0.0
    %360 = vmatprep.subr.mxu0 0.0
    %361 = vmatpush1.msra.mxu0 0.0
    %362 = vmatprep.subr.mxu0 0.0
    %363 = vmatpush1.msra.mxu0 0.0
    %364 = vmatprep.subr.mxu0 0.0
    %365 = vmatpush1.msra.mxu0 0.0
    %366 = vmatprep.subr.mxu0 0.0
    %367 = vmatpush1.msra.mxu0 0.0
    %368 = vmatprep.subr.mxu0 0.0
    %369 = vmatpush1.msra.mxu0 0.0
    %370 = vmatprep.subr.mxu0 0.0
    %371 = vmatpush1.msra.mxu0 0.0
    %372 = vmatprep.subr.mxu0 0.0
    %373 = vmatpush1.msra.mxu0 0.0
    %374 = vmatprep.subr.mxu0 0.0
    %375 = vmatpush1.msra.mxu0 0.0
    %376 = vmatprep.subr.mxu0 0.0
    %377 = vmatpush1.msra.mxu0 0.0
    %378 = vmatprep.subr.mxu0 0.0
    %379 = vmatpush1.msra.mxu0 0.0
    %380 = vmatprep.subr.mxu0 0.0
    %381 = vmatpush1.msra.mxu0 0.0
    %382 = vmatprep.subr.mxu0 0.0
    %383 = vmatpush1.msra.mxu0 0.0
    %384 = vmatprep.subr.mxu0 0.0
    %385 = vmatpush1.msra.mxu0 0.0
    %386 = vmatprep.subr.mxu0 0.0
    %387 = vmatpush1.msra.mxu0 0.0
    %388 = vmatprep.subr.mxu0 0.0
    %389 = vmatpush1.msra.mxu0 0.0
    %390 = vmatprep.mubr.f32.mxu0 0.0
    %391 = vmatmul.mubr.f32.gmra.mrb[0].mxu0 %v324
    %v392 = vpop.f32.mrb[0].mxu0
    %v393 = vadd.f32 0.0, %v392
    %v394 = vpop.f32.mrb[0].mxu0
    %395 = vdwg.mxu0
    %v396 = vadd.f32 %v312, %v393
    %v397 = vxor.u32 %v396, 2147483648
    %v398 = vmul.f32 %v397, 1.442695
    %v399 = vpow.pop %v398
    %v400 = vadd.f32 %v399, 1.0
    %v401 = vrcp.pop %v400
    %v402 = vmul.f32 1.0, %v401
    %v403 = vtanh.pop %v396
    %v404 = vmul.f32 %v402, %v162
    %406 = vrot.lane.b32.xlu0 %v403, 64
    %v407 = vpop.permute.xlu0 %406
    %v409 = vmul.f32 %v402, %v407
    %411 = vrot.lane.b32.xlu0 %v409, 32
    %v412 = vpop.permute.xlu0 %411
    %v414 = vadd.f32 %v404, %v412
    %v415 = vtanh.pop %v414
    %417 = vrot.lane.b32.xlu0 %v415, 64
    %v418 = vpop.permute.xlu0 %417
    %v420 = vmul.f32 %v402, %v418
    %422 = vrot.lane.b32.xlu0 %v420, 32
    %v423 = vpop.permute.xlu0 %422
    %425 = vrot.lane.b32.xlu0 %v302, 64
    %v426 = vpop.permute.xlu0 %425
    %v428 = vsel %vm64, %v423, %v426
    %v430 = vsel %vm66, %v428, 0
    %432 = vmatprep.subr.mxu0 0.0
    %433 = vmatpush1.msra.mxu0 %v45
    %434 = vmatprep.subr.mxu0 0.0
    %435 = vmatpush1.msra.mxu0 %v46
    %436 = vmatprep.subr.mxu0 0.0
    %437 = vmatpush1.msra.mxu0 %v47
    %438 = vmatprep.subr.mxu0 0.0
    %439 = vmatpush1.msra.mxu0 %v48
    %440 = vmatprep.subr.mxu0 0.0
    %441 = vmatpush1.msra.mxu0 %v49
    %442 = vmatprep.subr.mxu0 0.0
    %443 = vmatpush1.msra.mxu0 %v50
    %444 = vmatprep.subr.mxu0 0.0
    %445 = vmatpush1.msra.mxu0 %v51
    %446 = vmatprep.subr.mxu0 0.0
    %447 = vmatpush1.msra.mxu0 %v52
    %448 = vmatprep.subr.mxu0 0.0
    %449 = vmatpush1.msra.mxu0 0.0
    %450 = vmatprep.subr.mxu0 0.0
    %451 = vmatpush1.msra.mxu0 0.0
    %452 = vmatprep.subr.mxu0 0.0
    %453 = vmatpush1.msra.mxu0 0.0
    %454 = vmatprep.subr.mxu0 0.0
    %455 = vmatpush1.msra.mxu0 0.0
    %456 = vmatprep.subr.mxu0 0.0
    %457 = vmatpush1.msra.mxu0 0.0
    %458 = vmatprep.subr.mxu0 0.0
    %459 = vmatpush1.msra.mxu0 0.0
    %460 = vmatprep.subr.mxu0 0.0
    %461 = vmatpush1.msra.mxu0 0.0
    %462 = vmatprep.subr.mxu0 0.0
    %463 = vmatpush1.msra.mxu0 0.0
    %464 = vmatprep.subr.mxu0 0.0
    %465 = vmatpush1.msra.mxu0 0.0
    %466 = vmatprep.subr.mxu0 0.0
    %467 = vmatpush1.msra.mxu0 0.0
    %468 = vmatprep.subr.mxu0 0.0
    %469 = vmatpush1.msra.mxu0 0.0
    %470 = vmatprep.subr.mxu0 0.0
    %471 = vmatpush1.msra.mxu0 0.0
    %472 = vmatprep.subr.mxu0 0.0
    %473 = vmatpush1.msra.mxu0 0.0
    %474 = vmatprep.subr.mxu0 0.0
    %475 = vmatpush1.msra.mxu0 0.0
    %476 = vmatprep.subr.mxu0 0.0
    %477 = vmatpush1.msra.mxu0 0.0
    %478 = vmatprep.subr.mxu0 0.0
    %479 = vmatpush1.msra.mxu0 0.0
    %480 = vmatprep.subr.mxu0 0.0
    %481 = vmatpush1.msra.mxu0 0.0
    %482 = vmatprep.subr.mxu0 0.0
    %483 = vmatpush1.msra.mxu0 0.0
    %484 = vmatprep.subr.mxu0 0.0
    %485 = vmatpush1.msra.mxu0 0.0
    %486 = vmatprep.subr.mxu0 0.0
    %487 = vmatpush1.msra.mxu0 0.0
    %488 = vmatprep.subr.mxu0 0.0
    %489 = vmatpush1.msra.mxu0 0.0
    %490 = vmatprep.subr.mxu0 0.0
    %491 = vmatpush1.msra.mxu0 0.0
    %492 = vmatprep.subr.mxu0 0.0
    %493 = vmatpush1.msra.mxu0 0.0
    %494 = vmatprep.subr.mxu0 0.0
    %495 = vmatpush1.msra.mxu0 0.0
    %496 = vmatprep.mubr.f32.mxu0 0.0
    %497 = vmatmul.mubr.f32.gmra.mrb[0].mxu0 %v430
    %v498 = vpop.f32.mrb[0].mxu0
    %v499 = vadd.f32 %v182, %v498
    %v500 = vpop.f32.mrb[0].mxu0
    %501 = vdwg.mxu0
    %v502 = vxor.u32 %v499, 2147483648
    %v503 = vmul.f32 %v502, 1.442695
    %v504 = vpow.pop %v503
    %v505 = vadd.f32 %v504, 1.0
    %v506 = vrcp.pop %v505
    %v507 = vmul.f32 1.0, %v506
    %v508 = vtanh.pop %v499
    %v509 = vmul.f32 %v507, %v309
    %511 = vrot.lane.b32.xlu0 %v508, 64
    %v512 = vpop.permute.xlu0 %511
    %v514 = vmul.f32 %v507, %v512
    %516 = vrot.lane.b32.xlu0 %v514, 32
    %v517 = vpop.permute.xlu0 %516
    %v519 = vadd.f32 %v509, %v517
    %v520 = vtanh.pop %v519
    %522 = vrot.lane.b32.xlu0 %v520, 64
    %v523 = vpop.permute.xlu0 %522
    %v525 = vmul.f32 %v507, %v523
    %527 = vset.pattern.permute.xlu0 0
    %528 = vperm.xlu0 %527, %v314
    %v529 = vpop.permute.xlu0 %528
    %v531 = vmul.f32 %v529, %v525
    %v532 = vsub.f32 1.0, %v314
    %534 = vset.pattern.permute.xlu0 0
    %535 = vperm.xlu0 %534, %v532
    %v536 = vpop.permute.xlu0 %535
    %v538 = vmul.f32 %v536, %v302
    %v539 = vadd.f32 %v531, %v538
    %v540 = vmul.f32 %v529, %v519
    %v541 = vmul.f32 %v536, %v309
    %v542 = vadd.f32 %v540, %v541
    %s543 = scalar_lea.vmem %s5, 8
    %544 = vst.msk [vmem:[%s543] sm:$0xff] %vm64, %v423
    %s545 = scalar_lea.vmem %s0, 16
    %v546 = vld [vmem:[%s545] sm:$0xff]
    %s547 = scalar_lea.vmem %s1, 16
    %v548 = vld [vmem:[%s547] sm:$0xff]
    %550 = vrot.lane.b32.xlu0 %v539, 32
    %v551 = vpop.permute.xlu0 %550
    %553 = vrot.lane.b32.xlu0 %v420, 64
    %v554 = vpop.permute.xlu0 %553
    %v556 = vsel %vm64, %v551, %v554
    %v558 = vsel %vm66, %v556, 0
    %560 = vmatprep.subr.mxu0 0.0
    %561 = vmatpush1.msra.mxu0 %v37
    %562 = vmatprep.subr.mxu0 0.0
    %563 = vmatpush1.msra.mxu0 %v38
    %564 = vmatprep.subr.mxu0 0.0
    %565 = vmatpush1.msra.mxu0 %v39
    %566 = vmatprep.subr.mxu0 0.0
    %567 = vmatpush1.msra.mxu0 %v40
    %568 = vmatprep.subr.mxu0 0.0
    %569 = vmatpush1.msra.mxu0 %v41
    %570 = vmatprep.subr.mxu0 0.0
    %571 = vmatpush1.msra.mxu0 %v42
    %572 = vmatprep.subr.mxu0 0.0
    %573 = vmatpush1.msra.mxu0 %v43
    %574 = vmatprep.subr.mxu0 0.0
    %575 = vmatpush1.msra.mxu0 %v44
    %576 = vmatprep.subr.mxu0 0.0
    %577 = vmatpush1.msra.mxu0 0.0
    %578 = vmatprep.subr.mxu0 0.0
    %579 = vmatpush1.msra.mxu0 0.0
    %580 = vmatprep.subr.mxu0 0.0
    %581 = vmatpush1.msra.mxu0 0.0
    %582 = vmatprep.subr.mxu0 0.0
    %583 = vmatpush1.msra.mxu0 0.0
    %584 = vmatprep.subr.mxu0 0.0
    %585 = vmatpush1.msra.mxu0 0.0
    %586 = vmatprep.subr.mxu0 0.0
    %587 = vmatpush1.msra.mxu0 0.0
    %588 = vmatprep.subr.mxu0 0.0
    %589 = vmatpush1.msra.mxu0 0.0
    %590 = vmatprep.subr.mxu0 0.0
    %591 = vmatpush1.msra.mxu0 0.0
    %592 = vmatprep.subr.mxu0 0.0
    %593 = vmatpush1.msra.mxu0 0.0
    %594 = vmatprep.subr.mxu0 0.0
    %595 = vmatpush1.msra.mxu0 0.0
    %596 = vmatprep.subr.mxu0 0.0
    %597 = vmatpush1.msra.mxu0 0.0
    %598 = vmatprep.subr.mxu0 0.0
    %599 = vmatpush1.msra.mxu0 0.0
    %600 = vmatprep.subr.mxu0 0.0
    %601 = vmatpush1.msra.mxu0 0.0
    %602 = vmatprep.subr.mxu0 0.0
    %603 = vmatpush1.msra.mxu0 0.0
    %604 = vmatprep.subr.mxu0 0.0
    %605 = vmatpush1.msra.mxu0 0.0
    %606 = vmatprep.subr.mxu0 0.0
    %607 = vmatpush1.msra.mxu0 0.0
    %608 = vmatprep.subr.mxu0 0.0
    %609 = vmatpush1.msra.mxu0 0.0
    %610 = vmatprep.subr.mxu0 0.0
    %611 = vmatpush1.msra.mxu0 0.0
    %612 = vmatprep.subr.mxu0 0.0
    %613 = vmatpush1.msra.mxu0 0.0
    %614 = vmatprep.subr.mxu0 0.0
    %615 = vmatpush1.msra.mxu0 0.0
    %616 = vmatprep.subr.mxu0 0.0
    %617 = vmatpush1.msra.mxu0 0.0
    %618 = vmatprep.subr.mxu0 0.0
    %619 = vmatpush1.msra.mxu0 0.0
    %620 = vmatprep.subr.mxu0 0.0
    %621 = vmatpush1.msra.mxu0 0.0
    %622 = vmatprep.subr.mxu0 0.0
    %623 = vmatpush1.msra.mxu0 0.0
    %624 = vmatprep.mubr.f32.mxu0 0.0
    %625 = vmatmul.mubr.f32.gmra.mrb[0].mxu0 %v558
    %v626 = vpop.f32.mrb[0].mxu0
    %v627 = vadd.f32 0.0, %v626
    %v628 = vpop.f32.mrb[0].mxu0
    %629 = vdwg.mxu0
    %v630 = vadd.f32 %v546, %v627
    %v631 = vxor.u32 %v630, 2147483648
    %v632 = vmul.f32 %v631, 1.442695
    %v633 = vpow.pop %v632
    %v634 = vadd.f32 %v633, 1.0
    %v635 = vrcp.pop %v634
    %v636 = vmul.f32 1.0, %v635
    %v637 = vtanh.pop %v630
    %v638 = vmul.f32 %v636, %v414
    %640 = vrot.lane.b32.xlu0 %v637, 64
    %v641 = vpop.permute.xlu0 %640
    %v643 = vmul.f32 %v636, %v641
    %645 = vrot.lane.b32.xlu0 %v643, 32
    %v646 = vpop.permute.xlu0 %645
    %v648 = vadd.f32 %v638, %v646
    %v649 = vtanh.pop %v648
    %651 = vrot.lane.b32.xlu0 %v649, 64
    %v652 = vpop.permute.xlu0 %651
    %v654 = vmul.f32 %v636, %v652
    %656 = vrot.lane.b32.xlu0 %v654, 32
    %v657 = vpop.permute.xlu0 %656
    %659 = vrot.lane.b32.xlu0 %v539, 64
    %v660 = vpop.permute.xlu0 %659
    %v662 = vsel %vm64, %v657, %v660
    %v664 = vsel %vm66, %v662, 0
    %666 = vmatprep.subr.mxu0 0.0
    %667 = vmatpush1.msra.mxu0 %v45
    %668 = vmatprep.subr.mxu0 0.0
    %669 = vmatpush1.msra.mxu0 %v46
    %670 = vmatprep.subr.mxu0 0.0
    %671 = vmatpush1.msra.mxu0 %v47
    %672 = vmatprep.subr.mxu0 0.0
    %673 = vmatpush1.msra.mxu0 %v48
    %674 = vmatprep.subr.mxu0 0.0
    %675 = vmatpush1.msra.mxu0 %v49
    %676 = vmatprep.subr.mxu0 0.0
    %677 = vmatpush1.msra.mxu0 %v50
    %678 = vmatprep.subr.mxu0 0.0
    %679 = vmatpush1.msra.mxu0 %v51
    %680 = vmatprep.subr.mxu0 0.0
    %681 = vmatpush1.msra.mxu0 %v52
    %682 = vmatprep.subr.mxu0 0.0
    %683 = vmatpush1.msra.mxu0 0.0
    %684 = vmatprep.subr.mxu0 0.0
    %685 = vmatpush1.msra.mxu0 0.0
    %686 = vmatprep.subr.mxu0 0.0
    %687 = vmatpush1.msra.mxu0 0.0
    %688 = vmatprep.subr.mxu0 0.0
    %689 = vmatpush1.msra.mxu0 0.0
    %690 = vmatprep.subr.mxu0 0.0
    %691 = vmatpush1.msra.mxu0 0.0
    %692 = vmatprep.subr.mxu0 0.0
    %693 = vmatpush1.msra.mxu0 0.0
    %694 = vmatprep.subr.mxu0 0.0
    %695 = vmatpush1.msra.mxu0 0.0
    %696 = vmatprep.subr.mxu0 0.0
    %697 = vmatpush1.msra.mxu0 0.0
    %698 = vmatprep.subr.mxu0 0.0
    %699 = vmatpush1.msra.mxu0 0.0
    %700 = vmatprep.subr.mxu0 0.0
    %701 = vmatpush1.msra.mxu0 0.0
    %702 = vmatprep.subr.mxu0 0.0
    %703 = vmatpush1.msra.mxu0 0.0
    %704 = vmatprep.subr.mxu0 0.0
    %705 = vmatpush1.msra.mxu0 0.0
    %706 = vmatprep.subr.mxu0 0.0
    %707 = vmatpush1.msra.mxu0 0.0
    %708 = vmatprep.subr.mxu0 0.0
    %709 = vmatpush1.msra.mxu0 0.0
    %710 = vmatprep.subr.mxu0 0.0
    %711 = vmatpush1.msra.mxu0 0.0
    %712 = vmatprep.subr.mxu0 0.0
    %713 = vmatpush1.msra.mxu0 0.0
    %714 = vmatprep.subr.mxu0 0.0
    %715 = vmatpush1.msra.mxu0 0.0
    %716 = vmatprep.subr.mxu0 0.0
    %717 = vmatpush1.msra.mxu0 0.0
    %718 = vmatprep.subr.mxu0 0.0
    %719 = vmatpush1.msra.mxu0 0.0
    %720 = vmatprep.subr.mxu0 0.0
    %721 = vmatpush1.msra.mxu0 0.0
    %722 = vmatprep.subr.mxu0 0.0
    %723 = vmatpush1.msra.mxu0 0.0
    %724 = vmatprep.subr.mxu0 0.0
    %725 = vmatpush1.msra.mxu0 0.0
    %726 = vmatprep.subr.mxu0 0.0
    %727 = vmatpush1.msra.mxu0 0.0
    %728 = vmatprep.subr.mxu0 0.0
    %729 = vmatpush1.msra.mxu0 0.0
    %730 = vmatprep.mubr.f32.mxu0 0.0
    %731 = vmatmul.mubr.f32.gmra.mrb[0].mxu0 %v664
    %v732 = vpop.f32.mrb[0].mxu0
    %v733 = vadd.f32 %v182, %v732
    %v734 = vpop.f32.mrb[0].mxu0
    %735 = vdwg.mxu0
    %v736 = vxor.u32 %v733, 2147483648
    %v737 = vmul.f32 %v736, 1.442695
    %v738 = vpow.pop %v737
    %v739 = vadd.f32 %v738, 1.0
    %v740 = vrcp.pop %v739
    %v741 = vmul.f32 1.0, %v740
    %v742 = vtanh.pop %v733
    %v743 = vmul.f32 %v741, %v542
    %745 = vrot.lane.b32.xlu0 %v742, 64
    %v746 = vpop.permute.xlu0 %745
    %v748 = vmul.f32 %v741, %v746
    %750 = vrot.lane.b32.xlu0 %v748, 32
    %v751 = vpop.permute.xlu0 %750
    %v753 = vadd.f32 %v743, %v751
    %v754 = vtanh.pop %v753
    %756 = vrot.lane.b32.xlu0 %v754, 64
    %v757 = vpop.permute.xlu0 %756
    %v759 = vmul.f32 %v741, %v757
    %761 = vset.pattern.permute.xlu0 0
    %762 = vperm.xlu0 %761, %v548
    %v763 = vpop.permute.xlu0 %762
    %v765 = vmul.f32 %v763, %v759
    %v766 = vsub.f32 1.0, %v548
    %768 = vset.pattern.permute.xlu0 0
    %769 = vperm.xlu0 %768, %v766
    %v770 = vpop.permute.xlu0 %769
    %v772 = vmul.f32 %v770, %v539
    %v773 = vadd.f32 %v765, %v772
    %v774 = vmul.f32 %v763, %v753
    %v775 = vmul.f32 %v770, %v542
    %v776 = vadd.f32 %v774, %v775
    %s777 = scalar_lea.vmem %s5, 16
    %778 = vst.msk [vmem:[%s777] sm:$0xff] %vm64, %v657
    %s779 = scalar_lea.vmem %s0, 24
    %v780 = vld [vmem:[%s779] sm:$0xff]
    %s781 = scalar_lea.vmem %s1, 24
    %v782 = vld [vmem:[%s781] sm:$0xff]
    %784 = vrot.lane.b32.xlu0 %v773, 32
    %v785 = vpop.permute.xlu0 %784
    %787 = vrot.lane.b32.xlu0 %v654, 64
    %v788 = vpop.permute.xlu0 %787
    %v790 = vsel %vm64, %v785, %v788
    %v792 = vsel %vm66, %v790, 0
    %794 = vmatprep.subr.mxu0 0.0
    %795 = vmatpush1.msra.mxu0 %v37
    %796 = vmatprep.subr.mxu0 0.0
    %797 = vmatpush1.msra.mxu0 %v38
    %798 = vmatprep.subr.mxu0 0.0
    %799 = vmatpush1.msra.mxu0 %v39
    %800 = vmatprep.subr.mxu0 0.0
    %801 = vmatpush1.msra.mxu0 %v40
    %802 = vmatprep.subr.mxu0 0.0
    %803 = vmatpush1.msra.mxu0 %v41
    %804 = vmatprep.subr.mxu0 0.0
    %805 = vmatpush1.msra.mxu0 %v42
    %806 = vmatprep.subr.mxu0 0.0
    %807 = vmatpush1.msra.mxu0 %v43
    %808 = vmatprep.subr.mxu0 0.0
    %809 = vmatpush1.msra.mxu0 %v44
    %810 = vmatprep.subr.mxu0 0.0
    %811 = vmatpush1.msra.mxu0 0.0
    %812 = vmatprep.subr.mxu0 0.0
    %813 = vmatpush1.msra.mxu0 0.0
    %814 = vmatprep.subr.mxu0 0.0
    %815 = vmatpush1.msra.mxu0 0.0
    %816 = vmatprep.subr.mxu0 0.0
    %817 = vmatpush1.msra.mxu0 0.0
    %818 = vmatprep.subr.mxu0 0.0
    %819 = vmatpush1.msra.mxu0 0.0
    %820 = vmatprep.subr.mxu0 0.0
    %821 = vmatpush1.msra.mxu0 0.0
    %822 = vmatprep.subr.mxu0 0.0
    %823 = vmatpush1.msra.mxu0 0.0
    %824 = vmatprep.subr.mxu0 0.0
    %825 = vmatpush1.msra.mxu0 0.0
    %826 = vmatprep.subr.mxu0 0.0
    %827 = vmatpush1.msra.mxu0 0.0
    %828 = vmatprep.subr.mxu0 0.0
    %829 = vmatpush1.msra.mxu0 0.0
    %830 = vmatprep.subr.mxu0 0.0
    %831 = vmatpush1.msra.mxu0 0.0
    %832 = vmatprep.subr.mxu0 0.0
    %833 = vmatpush1.msra.mxu0 0.0
    %834 = vmatprep.subr.mxu0 0.0
    %835 = vmatpush1.msra.mxu0 0.0
    %836 = vmatprep.subr.mxu0 0.0
    %837 = vmatpush1.msra.mxu0 0.0
    %838 = vmatprep.subr.mxu0 0.0
    %839 = vmatpush1.msra.mxu0 0.0
    %840 = vmatprep.subr.mxu0 0.0
    %841 = vmatpush1.msra.mxu0 0.0
    %842 = vmatprep.subr.mxu0 0.0
    %843 = vmatpush1.msra.mxu0 0.0
    %844 = vmatprep.subr.mxu0 0.0
    %845 = vmatpush1.msra.mxu0 0.0
    %846 = vmatprep.subr.mxu0 0.0
    %847 = vmatpush1.msra.mxu0 0.0
    %848 = vmatprep.subr.mxu0 0.0
    %849 = vmatpush1.msra.mxu0 0.0
    %850 = vmatprep.subr.mxu0 0.0
    %851 = vmatpush1.msra.mxu0 0.0
    %852 = vmatprep.subr.mxu0 0.0
    %853 = vmatpush1.msra.mxu0 0.0
    %854 = vmatprep.subr.mxu0 0.0
    %855 = vmatpush1.msra.mxu0 0.0
    %856 = vmatprep.subr.mxu0 0.0
    %857 = vmatpush1.msra.mxu0 0.0
    %858 = vmatprep.mubr.f32.mxu0 0.0
    %859 = vmatmul.mubr.f32.gmra.mrb[0].mxu0 %v792
    %v860 = vpop.f32.mrb[0].mxu0
    %v861 = vadd.f32 0.0, %v860
    %v862 = vpop.f32.mrb[0].mxu0
    %863 = vdwg.mxu0
    %v864 = vadd.f32 %v780, %v861
    %v865 = vxor.u32 %v864, 2147483648
    %v866 = vmul.f32 %v865, 1.442695
    %v867 = vpow.pop %v866
    %v868 = vadd.f32 %v867, 1.0
    %v869 = vrcp.pop %v868
    %v870 = vmul.f32 1.0, %v869
    %v871 = vtanh.pop %v864
    %v872 = vmul.f32 %v870, %v648
    %874 = vrot.lane.b32.xlu0 %v871, 64
    %v875 = vpop.permute.xlu0 %874
    %v877 = vmul.f32 %v870, %v875
    %879 = vrot.lane.b32.xlu0 %v877, 32
    %v880 = vpop.permute.xlu0 %879
    %v882 = vadd.f32 %v872, %v880
    %v883 = vtanh.pop %v882
    %885 = vrot.lane.b32.xlu0 %v883, 64
    %v886 = vpop.permute.xlu0 %885
    %v888 = vmul.f32 %v870, %v886
    %890 = vrot.lane.b32.xlu0 %v888, 32
    %v891 = vpop.permute.xlu0 %890
    %893 = vrot.lane.b32.xlu0 %v773, 64
    %v894 = vpop.permute.xlu0 %893
    %v896 = vsel %vm64, %v891, %v894
    %v898 = vsel %vm66, %v896, 0
    %900 = vmatprep.subr.mxu0 0.0
    %901 = vmatpush1.msra.mxu0 %v45
    %902 = vmatprep.subr.mxu0 0.0
    %903 = vmatpush1.msra.mxu0 %v46
    %904 = vmatprep.subr.mxu0 0.0
    %905 = vmatpush1.msra.mxu0 %v47
    %906 = vmatprep.subr.mxu0 0.0
    %907 = vmatpush1.msra.mxu0 %v48
    %908 = vmatprep.subr.mxu0 0.0
    %909 = vmatpush1.msra.mxu0 %v49
    %910 = vmatprep.subr.mxu0 0.0
    %911 = vmatpush1.msra.mxu0 %v50
    %912 = vmatprep.subr.mxu0 0.0
    %913 = vmatpush1.msra.mxu0 %v51
    %914 = vmatprep.subr.mxu0 0.0
    %915 = vmatpush1.msra.mxu0 %v52
    %916 = vmatprep.subr.mxu0 0.0
    %917 = vmatpush1.msra.mxu0 0.0
    %918 = vmatprep.subr.mxu0 0.0
    %919 = vmatpush1.msra.mxu0 0.0
    %920 = vmatprep.subr.mxu0 0.0
    %921 = vmatpush1.msra.mxu0 0.0
    %922 = vmatprep.subr.mxu0 0.0
    %923 = vmatpush1.msra.mxu0 0.0
    %924 = vmatprep.subr.mxu0 0.0
    %925 = vmatpush1.msra.mxu0 0.0
    %926 = vmatprep.subr.mxu0 0.0
    %927 = vmatpush1.msra.mxu0 0.0
    %928 = vmatprep.subr.mxu0 0.0
    %929 = vmatpush1.msra.mxu0 0.0
    %930 = vmatprep.subr.mxu0 0.0
    %931 = vmatpush1.msra.mxu0 0.0
    %932 = vmatprep.subr.mxu0 0.0
    %933 = vmatpush1.msra.mxu0 0.0
    %934 = vmatprep.subr.mxu0 0.0
    %935 = vmatpush1.msra.mxu0 0.0
    %936 = vmatprep.subr.mxu0 0.0
    %937 = vmatpush1.msra.mxu0 0.0
    %938 = vmatprep.subr.mxu0 0.0
    %939 = vmatpush1.msra.mxu0 0.0
    %940 = vmatprep.subr.mxu0 0.0
    %941 = vmatpush1.msra.mxu0 0.0
    %942 = vmatprep.subr.mxu0 0.0
    %943 = vmatpush1.msra.mxu0 0.0
    %944 = vmatprep.subr.mxu0 0.0
    %945 = vmatpush1.msra.mxu0 0.0
    %946 = vmatprep.subr.mxu0 0.0
    %947 = vmatpush1.msra.mxu0 0.0
    %948 = vmatprep.subr.mxu0 0.0
    %949 = vmatpush1.msra.mxu0 0.0
    %950 = vmatprep.subr.mxu0 0.0
    %951 = vmatpush1.msra.mxu0 0.0
    %952 = vmatprep.subr.mxu0 0.0
    %953 = vmatpush1.msra.mxu0 0.0
    %954 = vmatprep.subr.mxu0 0.0
    %955 = vmatpush1.msra.mxu0 0.0
    %956 = vmatprep.subr.mxu0 0.0
    %957 = vmatpush1.msra.mxu0 0.0
    %958 = vmatprep.subr.mxu0 0.0
    %959 = vmatpush1.msra.mxu0 0.0
    %960 = vmatprep.subr.mxu0 0.0
    %961 = vmatpush1.msra.mxu0 0.0
    %962 = vmatprep.subr.mxu0 0.0
    %963 = vmatpush1.msra.mxu0 0.0
    %964 = vmatprep.mubr.f32.mxu0 0.0
    %965 = vmatmul.mubr.f32.gmra.mrb[0].mxu0 %v898
    %v966 = vpop.f32.mrb[0].mxu0
    %v967 = vadd.f32 %v182, %v966
    %v968 = vpop.f32.mrb[0].mxu0
    %969 = vdwg.mxu0
    %v970 = vxor.u32 %v967, 2147483648
    %v971 = vmul.f32 %v970, 1.442695
    %v972 = vpow.pop %v971
    %v973 = vadd.f32 %v972, 1.0
    %v974 = vrcp.pop %v973
    %v975 = vmul.f32 1.0, %v974
    %v976 = vtanh.pop %v967
    %v977 = vmul.f32 %v975, %v776
    %979 = vrot.lane.b32.xlu0 %v976, 64
    %v980 = vpop.permute.xlu0 %979
    %v982 = vmul.f32 %v975, %v980
    %984 = vrot.lane.b32.xlu0 %v982, 32
    %v985 = vpop.permute.xlu0 %984
    %v987 = vadd.f32 %v977, %v985
    %v988 = vtanh.pop %v987
    %990 = vrot.lane.b32.xlu0 %v988, 64
    %v991 = vpop.permute.xlu0 %990
    %v993 = vmul.f32 %v975, %v991
    %995 = vset.pattern.permute.xlu0 0
    %996 = vperm.xlu0 %995, %v782
    %v997 = vpop.permute.xlu0 %996
    %v999 = vmul.f32 %v997, %v993
    %v1000 = vsub.f32 1.0, %v782
    %1002 = vset.pattern.permute.xlu0 0
    %1003 = vperm.xlu0 %1002, %v1000
    %v1004 = vpop.permute.xlu0 %1003
    %v1006 = vmul.f32 %v1004, %v773
    %v1007 = vadd.f32 %v999, %v1006
    %v1008 = vmul.f32 %v997, %v987
    %v1009 = vmul.f32 %v1004, %v776
    %v1010 = vadd.f32 %v1008, %v1009
    %s1011 = scalar_lea.vmem %s5, 24
    %1012 = vst.msk [vmem:[%s1011] sm:$0xff] %vm64, %v891
    %s1013 = scalar_lea.vmem %s0, 32
    %v1014 = vld [vmem:[%s1013] sm:$0xff]
    %s1015 = scalar_lea.vmem %s1, 32
    %v1016 = vld [vmem:[%s1015] sm:$0xff]
    %1018 = vrot.lane.b32.xlu0 %v1007, 32
    %v1019 = vpop.permute.xlu0 %1018
    %1021 = vrot.lane.b32.xlu0 %v888, 64
    %v1022 = vpop.permute.xlu0 %1021
    %v1024 = vsel %vm64, %v1019, %v1022
    %v1026 = vsel %vm66, %v1024, 0
    %1028 = vmatprep.subr.mxu0 0.0
    %1029 = vmatpush1.msra.mxu0 %v37
    %1030 = vmatprep.subr.mxu0 0.0
    %1031 = vmatpush1.msra.mxu0 %v38
    %1032 = vmatprep.subr.mxu0 0.0
    %1033 = vmatpush1.msra.mxu0 %v39
    %1034 = vmatprep.subr.mxu0 0.0
    %1035 = vmatpush1.msra.mxu0 %v40
    %1036 = vmatprep.subr.mxu0 0.0
    %1037 = vmatpush1.msra.mxu0 %v41
    %1038 = vmatprep.subr.mxu0 0.0
    %1039 = vmatpush1.msra.mxu0 %v42
    %1040 = vmatprep.subr.mxu0 0.0
    %1041 = vmatpush1.msra.mxu0 %v43
    %1042 = vmatprep.subr.mxu0 0.0
    %1043 = vmatpush1.msra.mxu0 %v44
    %1044 = vmatprep.subr.mxu0 0.0
    %1045 = vmatpush1.msra.mxu0 0.0
    %1046 = vmatprep.subr.mxu0 0.0
    %1047 = vmatpush1.msra.mxu0 0.0
    %1048 = vmatprep.subr.mxu0 0.0
    %1049 = vmatpush1.msra.mxu0 0.0
    %1050 = vmatprep.subr.mxu0 0.0
    %1051 = vmatpush1.msra.mxu0 0.0
    %1052 = vmatprep.subr.mxu0 0.0
    %1053 = vmatpush1.msra.mxu0 0.0
    %1054 = vmatprep.subr.mxu0 0.0
    %1055 = vmatpush1.msra.mxu0 0.0
    %1056 = vmatprep.subr.mxu0 0.0
    %1057 = vmatpush1.msra.mxu0 0.0
    %1058 = vmatprep.subr.mxu0 0.0
    %1059 = vmatpush1.msra.mxu0 0.0
    %1060 = vmatprep.subr.mxu0 0.0
    %1061 = vmatpush1.msra.mxu0 0.0
    %1062 = vmatprep.subr.mxu0 0.0
    %1063 = vmatpush1.msra.mxu0 0.0
    %1064 = vmatprep.subr.mxu0 0.0
    %1065 = vmatpush1.msra.mxu0 0.0
    %1066 = vmatprep.subr.mxu0 0.0
    %1067 = vmatpush1.msra.mxu0 0.0
    %1068 = vmatprep.subr.mxu0 0.0
    %1069 = vmatpush1.msra.mxu0 0.0
    %1070 = vmatprep.subr.mxu0 0.0
    %1071 = vmatpush1.msra.mxu0 0.0
    %1072 = vmatprep.subr.mxu0 0.0
    %1073 = vmatpush1.msra.mxu0 0.0
    %1074 = vmatprep.subr.mxu0 0.0
    %1075 = vmatpush1.msra.mxu0 0.0
    %1076 = vmatprep.subr.mxu0 0.0
    %1077 = vmatpush1.msra.mxu0 0.0
    %1078 = vmatprep.subr.mxu0 0.0
    %1079 = vmatpush1.msra.mxu0 0.0
    %1080 = vmatprep.subr.mxu0 0.0
    %1081 = vmatpush1.msra.mxu0 0.0
    %1082 = vmatprep.subr.mxu0 0.0
    %1083 = vmatpush1.msra.mxu0 0.0
    %1084 = vmatprep.subr.mxu0 0.0
    %1085 = vmatpush1.msra.mxu0 0.0
    %1086 = vmatprep.subr.mxu0 0.0
    %1087 = vmatpush1.msra.mxu0 0.0
    %1088 = vmatprep.subr.mxu0 0.0
    %1089 = vmatpush1.msra.mxu0 0.0
    %1090 = vmatprep.subr.mxu0 0.0
    %1091 = vmatpush1.msra.mxu0 0.0
    %1092 = vmatprep.mubr.f32.mxu0 0.0
    %1093 = vmatmul.mubr.f32.gmra.mrb[0].mxu0 %v1026
    %v1094 = vpop.f32.mrb[0].mxu0
    %v1095 = vadd.f32 0.0, %v1094
    %v1096 = vpop.f32.mrb[0].mxu0
    %1097 = vdwg.mxu0
    %v1098 = vadd.f32 %v1014, %v1095
    %v1099 = vxor.u32 %v1098, 2147483648
    %v1100 = vmul.f32 %v1099, 1.442695
    %v1101 = vpow.pop %v1100
    %v1102 = vadd.f32 %v1101, 1.0
    %v1103 = vrcp.pop %v1102
    %v1104 = vmul.f32 1.0, %v1103
    %v1105 = vtanh.pop %v1098
    %v1106 = vmul.f32 %v1104, %v882
    %1108 = vrot.lane.b32.xlu0 %v1105, 64
    %v1109 = vpop.permute.xlu0 %1108
    %v1111 = vmul.f32 %v1104, %v1109
    %1113 = vrot.lane.b32.xlu0 %v1111, 32
    %v1114 = vpop.permute.xlu0 %1113
    %v1116 = vadd.f32 %v1106, %v1114
    %v1117 = vtanh.pop %v1116
    %1119 = vrot.lane.b32.xlu0 %v1117, 64
    %v1120 = vpop.permute.xlu0 %1119
    %v1122 = vmul.f32 %v1104, %v1120
    %1124 = vrot.lane.b32.xlu0 %v1122, 32
    %v1125 = vpop.permute.xlu0 %1124
    %1127 = vrot.lane.b32.xlu0 %v1007, 64
    %v1128 = vpop.permute.xlu0 %1127
    %v1130 = vsel %vm64, %v1125, %v1128
    %v1132 = vsel %vm66, %v1130, 0
    %1134 = vmatprep.subr.mxu0 0.0
    %1135 = vmatpush1.msra.mxu0 %v45
    %1136 = vmatprep.subr.mxu0 0.0
    %1137 = vmatpush1.msra.mxu0 %v46
    %1138 = vmatprep.subr.mxu0 0.0
    %1139 = vmatpush1.msra.mxu0 %v47
    %1140 = vmatprep.subr.mxu0 0.0
    %1141 = vmatpush1.msra.mxu0 %v48
    %1142 = vmatprep.subr.mxu0 0.0
    %1143 = vmatpush1.msra.mxu0 %v49
    %1144 = vmatprep.subr.mxu0 0.0
    %1145 = vmatpush1.msra.mxu0 %v50
    %1146 = vmatprep.subr.mxu0 0.0
    %1147 = vmatpush1.msra.mxu0 %v51
    %1148 = vmatprep.subr.mxu0 0.0
    %1149 = vmatpush1.msra.mxu0 %v52
    %1150 = vmatprep.subr.mxu0 0.0
    %1151 = vmatpush1.msra.mxu0 0.0
    %1152 = vmatprep.subr.mxu0 0.0
    %1153 = vmatpush1.msra.mxu0 0.0
    %1154 = vmatprep.subr.mxu0 0.0
    %1155 = vmatpush1.msra.mxu0 0.0
    %1156 = vmatprep.subr.mxu0 0.0
    %1157 = vmatpush1.msra.mxu0 0.0
    %1158 = vmatprep.subr.mxu0 0.0
    %1159 = vmatpush1.msra.mxu0 0.0
    %1160 = vmatprep.subr.mxu0 0.0
    %1161 = vmatpush1.msra.mxu0 0.0
    %1162 = vmatprep.subr.mxu0 0.0
    %1163 = vmatpush1.msra.mxu0 0.0
    %1164 = vmatprep.subr.mxu0 0.0
    %1165 = vmatpush1.msra.mxu0 0.0
    %1166 = vmatprep.subr.mxu0 0.0
    %1167 = vmatpush1.msra.mxu0 0.0
    %1168 = vmatprep.subr.mxu0 0.0
    %1169 = vmatpush1.msra.mxu0 0.0
    %1170 = vmatprep.subr.mxu0 0.0
    %1171 = vmatpush1.msra.mxu0 0.0
    %1172 = vmatprep.subr.mxu0 0.0
    %1173 = vmatpush1.msra.mxu0 0.0
    %1174 = vmatprep.subr.mxu0 0.0
    %1175 = vmatpush1.msra.mxu0 0.0
    %1176 = vmatprep.subr.mxu0 0.0
    %1177 = vmatpush1.msra.mxu0 0.0
    %1178 = vmatprep.subr.mxu0 0.0
    %1179 = vmatpush1.msra.mxu0 0.0
    %1180 = vmatprep.subr.mxu0 0.0
    %1181 = vmatpush1.msra.mxu0 0.0
    %1182 = vmatprep.subr.mxu0 0.0
    %1183 = vmatpush1.msra.mxu0 0.0
    %1184 = vmatprep.subr.mxu0 0.0
    %1185 = vmatpush1.msra.mxu0 0.0
    %1186 = vmatprep.subr.mxu0 0.0
    %1187 = vmatpush1.msra.mxu0 0.0
    %1188 = vmatprep.subr.mxu0 0.0
    %1189 = vmatpush1.msra.mxu0 0.0
    %1190 = vmatprep.subr.mxu0 0.0
    %1191 = vmatpush1.msra.mxu0 0.0
    %1192 = vmatprep.subr.mxu0 0.0
    %1193 = vmatpush1.msra.mxu0 0.0
    %1194 = vmatprep.subr.mxu0 0.0
    %1195 = vmatpush1.msra.mxu0 0.0
    %1196 = vmatprep.subr.mxu0 0.0
    %1197 = vmatpush1.msra.mxu0 0.0
    %1198 = vmatprep.mubr.f32.mxu0 0.0
    %1199 = vmatmul.mubr.f32.gmra.mrb[0].mxu0 %v1132
    %v1200 = vpop.f32.mrb[0].mxu0
    %v1201 = vadd.f32 %v182, %v1200
    %v1202 = vpop.f32.mrb[0].mxu0
    %1203 = vdwg.mxu0
    %v1204 = vxor.u32 %v1201, 2147483648
    %v1205 = vmul.f32 %v1204, 1.442695
    %v1206 = vpow.pop %v1205
    %v1207 = vadd.f32 %v1206, 1.0
    %v1208 = vrcp.pop %v1207
    %v1209 = vmul.f32 1.0, %v1208
    %v1210 = vtanh.pop %v1201
    %v1211 = vmul.f32 %v1209, %v1010
    %1213 = vrot.lane.b32.xlu0 %v1210, 64
    %v1214 = vpop.permute.xlu0 %1213
    %v1216 = vmul.f32 %v1209, %v1214
    %1218 = vrot.lane.b32.xlu0 %v1216, 32
    %v1219 = vpop.permute.xlu0 %1218
    %v1221 = vadd.f32 %v1211, %v1219
    %v1222 = vtanh.pop %v1221
    %1224 = vrot.lane.b32.xlu0 %v1222, 64
    %v1225 = vpop.permute.xlu0 %1224
    %v1227 = vmul.f32 %v1209, %v1225
    %1229 = vset.pattern.permute.xlu0 0
    %1230 = vperm.xlu0 %1229, %v1016
    %v1231 = vpop.permute.xlu0 %1230
    %v1233 = vmul.f32 %v1231, %v1227
    %v1234 = vsub.f32 1.0, %v1016
    %1236 = vset.pattern.permute.xlu0 0
    %1237 = vperm.xlu0 %1236, %v1234
    %v1238 = vpop.permute.xlu0 %1237
    %v1240 = vmul.f32 %v1238, %v1007
    %v1241 = vadd.f32 %v1233, %v1240
    %v1242 = vmul.f32 %v1231, %v1221
    %v1243 = vmul.f32 %v1238, %v1010
    %v1244 = vadd.f32 %v1242, %v1243
    %s1245 = scalar_lea.vmem %s5, 32
    %1246 = vst.msk [vmem:[%s1245] sm:$0xff] %vm64, %v1125
    %s1247 = scalar_lea.vmem %s0, 40
    %v1248 = vld [vmem:[%s1247] sm:$0xff]
    %s1249 = scalar_lea.vmem %s1, 40
    %v1250 = vld [vmem:[%s1249] sm:$0xff]
    %1252 = vrot.lane.b32.xlu0 %v1241, 32
    %v1253 = vpop.permute.xlu0 %1252
    %1255 = vrot.lane.b32.xlu0 %v1122, 64
    %v1256 = vpop.permute.xlu0 %1255
    %v1258 = vsel %vm64, %v1253, %v1256
    %v1260 = vsel %vm66, %v1258, 0
    %1262 = vmatprep.subr.mxu0 0.0
    %1263 = vmatpush1.msra.mxu0 %v37
    %1264 = vmatprep.subr.mxu0 0.0
    %1265 = vmatpush1.msra.mxu0 %v38
    %1266 = vmatprep.subr.mxu0 0.0
    %1267 = vmatpush1.msra.mxu0 %v39
    %1268 = vmatprep.subr.mxu0 0.0
    %1269 = vmatpush1.msra.mxu0 %v40
    %1270 = vmatprep.subr.mxu0 0.0
    %1271 = vmatpush1.msra.mxu0 %v41
    %1272 = vmatprep.subr.mxu0 0.0
    %1273 = vmatpush1.msra.mxu0 %v42
    %1274 = vmatprep.subr.mxu0 0.0
    %1275 = vmatpush1.msra.mxu0 %v43
    %1276 = vmatprep.subr.mxu0 0.0
    %1277 = vmatpush1.msra.mxu0 %v44
    %1278 = vmatprep.subr.mxu0 0.0
    %1279 = vmatpush1.msra.mxu0 0.0
    %1280 = vmatprep.subr.mxu0 0.0
    %1281 = vmatpush1.msra.mxu0 0.0
    %1282 = vmatprep.subr.mxu0 0.0
    %1283 = vmatpush1.msra.mxu0 0.0
    %1284 = vmatprep.subr.mxu0 0.0
    %1285 = vmatpush1.msra.mxu0 0.0
    %1286 = vmatprep.subr.mxu0 0.0
    %1287 = vmatpush1.msra.mxu0 0.0
    %1288 = vmatprep.subr.mxu0 0.0
    %1289 = vmatpush1.msra.mxu0 0.0
    %1290 = vmatprep.subr.mxu0 0.0
    %1291 = vmatpush1.msra.mxu0 0.0
    %1292 = vmatprep.subr.mxu0 0.0
    %1293 = vmatpush1.msra.mxu0 0.0
    %1294 = vmatprep.subr.mxu0 0.0
    %1295 = vmatpush1.msra.mxu0 0.0
    %1296 = vmatprep.subr.mxu0 0.0
    %1297 = vmatpush1.msra.mxu0 0.0
    %1298 = vmatprep.subr.mxu0 0.0
    %1299 = vmatpush1.msra.mxu0 0.0
    %1300 = vmatprep.subr.mxu0 0.0
    %1301 = vmatpush1.msra.mxu0 0.0
    %1302 = vmatprep.subr.mxu0 0.0
    %1303 = vmatpush1.msra.mxu0 0.0
    %1304 = vmatprep.subr.mxu0 0.0
    %1305 = vmatpush1.msra.mxu0 0.0
    %1306 = vmatprep.subr.mxu0 0.0
    %1307 = vmatpush1.msra.mxu0 0.0
    %1308 = vmatprep.subr.mxu0 0.0
    %1309 = vmatpush1.msra.mxu0 0.0
    %1310 = vmatprep.subr.mxu0 0.0
    %1311 = vmatpush1.msra.mxu0 0.0
    %1312 = vmatprep.subr.mxu0 0.0
    %1313 = vmatpush1.msra.mxu0 0.0
    %1314 = vmatprep.subr.mxu0 0.0
    %1315 = vmatpush1.msra.mxu0 0.0
    %1316 = vmatprep.subr.mxu0 0.0
    %1317 = vmatpush1.msra.mxu0 0.0
    %1318 = vmatprep.subr.mxu0 0.0
    %1319 = vmatpush1.msra.mxu0 0.0
    %1320 = vmatprep.subr.mxu0 0.0
    %1321 = vmatpush1.msra.mxu0 0.0
    %1322 = vmatprep.subr.mxu0 0.0
    %1323 = vmatpush1.msra.mxu0 0.0
    %1324 = vmatprep.subr.mxu0 0.0
    %1325 = vmatpush1.msra.mxu0 0.0
    %1326 = vmatprep.mubr.f32.mxu0 0.0
    %1327 = vmatmul.mubr.f32.gmra.mrb[0].mxu0 %v1260
    %v1328 = vpop.f32.mrb[0].mxu0
    %v1329 = vadd.f32 0.0, %v1328
    %v1330 = vpop.f32.mrb[0].mxu0
    %1331 = vdwg.mxu0
    %v1332 = vadd.f32 %v1248, %v1329
    %v1333 = vxor.u32 %v1332, 2147483648
    %v1334 = vmul.f32 %v1333, 1.442695
    %v1335 = vpow.pop %v1334
    %v1336 = vadd.f32 %v1335, 1.0
    %v1337 = vrcp.pop %v1336
    %v1338 = vmul.f32 1.0, %v1337
    %v1339 = vtanh.pop %v1332
    %v1340 = vmul.f32 %v1338, %v1116
    %1342 = vrot.lane.b32.xlu0 %v1339, 64
    %v1343 = vpop.permute.xlu0 %1342
    %v1345 = vmul.f32 %v1338, %v1343
    %1347 = vrot.lane.b32.xlu0 %v1345, 32
    %v1348 = vpop.permute.xlu0 %1347
    %v1350 = vadd.f32 %v1340, %v1348
    %v1351 = vtanh.pop %v1350
    %1353 = vrot.lane.b32.xlu0 %v1351, 64
    %v1354 = vpop.permute.xlu0 %1353
    %v1356 = vmul.f32 %v1338, %v1354
    %1358 = vrot.lane.b32.xlu0 %v1356, 32
    %v1359 = vpop.permute.xlu0 %1358
    %1361 = vrot.lane.b32.xlu0 %v1241, 64
    %v1362 = vpop.permute.xlu0 %1361
    %v1364 = vsel %vm64, %v1359, %v1362
    %v1366 = vsel %vm66, %v1364, 0
    %1368 = vmatprep.subr.mxu0 0.0
    %1369 = vmatpush1.msra.mxu0 %v45
    %1370 = vmatprep.subr.mxu0 0.0
    %1371 = vmatpush1.msra.mxu0 %v46
    %1372 = vmatprep.subr.mxu0 0.0
    %1373 = vmatpush1.msra.mxu0 %v47
    %1374 = vmatprep.subr.mxu0 0.0
    %1375 = vmatpush1.msra.mxu0 %v48
    %1376 = vmatprep.subr.mxu0 0.0
    %1377 = vmatpush1.msra.mxu0 %v49
    %1378 = vmatprep.subr.mxu0 0.0
    %1379 = vmatpush1.msra.mxu0 %v50
    %1380 = vmatprep.subr.mxu0 0.0
    %1381 = vmatpush1.msra.mxu0 %v51
    %1382 = vmatprep.subr.mxu0 0.0
    %1383 = vmatpush1.msra.mxu0 %v52
    %1384 = vmatprep.subr.mxu0 0.0
    %1385 = vmatpush1.msra.mxu0 0.0
    %1386 = vmatprep.subr.mxu0 0.0
    %1387 = vmatpush1.msra.mxu0 0.0
    %1388 = vmatprep.subr.mxu0 0.0
    %1389 = vmatpush1.msra.mxu0 0.0
    %1390 = vmatprep.subr.mxu0 0.0
    %1391 = vmatpush1.msra.mxu0 0.0
    %1392 = vmatprep.subr.mxu0 0.0
    %1393 = vmatpush1.msra.mxu0 0.0
    %1394 = vmatprep.subr.mxu0 0.0
    %1395 = vmatpush1.msra.mxu0 0.0
    %1396 = vmatprep.subr.mxu0 0.0
    %1397 = vmatpush1.msra.mxu0 0.0
    %1398 = vmatprep.subr.mxu0 0.0
    %1399 = vmatpush1.msra.mxu0 0.0
    %1400 = vmatprep.subr.mxu0 0.0
    %1401 = vmatpush1.msra.mxu0 0.0
    %1402 = vmatprep.subr.mxu0 0.0
    %1403 = vmatpush1.msra.mxu0 0.0
    %1404 = vmatprep.subr.mxu0 0.0
    %1405 = vmatpush1.msra.mxu0 0.0
    %1406 = vmatprep.subr.mxu0 0.0
    %1407 = vmatpush1.msra.mxu0 0.0
    %1408 = vmatprep.subr.mxu0 0.0
    %1409 = vmatpush1.msra.mxu0 0.0
    %1410 = vmatprep.subr.mxu0 0.0
    %1411 = vmatpush1.msra.mxu0 0.0
    %1412 = vmatprep.subr.mxu0 0.0
    %1413 = vmatpush1.msra.mxu0 0.0
    %1414 = vmatprep.subr.mxu0 0.0
    %1415 = vmatpush1.msra.mxu0 0.0
    %1416 = vmatprep.subr.mxu0 0.0
    %1417 = vmatpush1.msra.mxu0 0.0
    %1418 = vmatprep.subr.mxu0 0.0
    %1419 = vmatpush1.msra.mxu0 0.0
    %1420 = vmatprep.subr.mxu0 0.0
    %1421 = vmatpush1.msra.mxu0 0.0
    %1422 = vmatprep.subr.mxu0 0.0
    %1423 = vmatpush1.msra.mxu0 0.0
    %1424 = vmatprep.subr.mxu0 0.0
    %1425 = vmatpush1.msra.mxu0 0.0
    %1426 = vmatprep.subr.mxu0 0.0
    %1427 = vmatpush1.msra.mxu0 0.0
    %1428 = vmatprep.subr.mxu0 0.0
    %1429 = vmatpush1.msra.mxu0 0.0
    %1430 = vmatprep.subr.mxu0 0.0
    %1431 = vmatpush1.msra.mxu0 0.0
    %1432 = vmatprep.mubr.f32.mxu0 0.0
    %1433 = vmatmul.mubr.f32.gmra.mrb[0].mxu0 %v1366
    %v1434 = vpop.f32.mrb[0].mxu0
    %v1435 = vadd.f32 %v182, %v1434
    %v1436 = vpop.f32.mrb[0].mxu0
    %1437 = vdwg.mxu0
    %v1438 = vxor.u32 %v1435, 2147483648
    %v1439 = vmul.f32 %v1438, 1.442695
    %v1440 = vpow.pop %v1439
    %v1441 = vadd.f32 %v1440, 1.0
    %v1442 = vrcp.pop %v1441
    %v1443 = vmul.f32 1.0, %v1442
    %v1444 = vtanh.pop %v1435
    %v1445 = vmul.f32 %v1443, %v1244
    %1447 = vrot.lane.b32.xlu0 %v1444, 64
    %v1448 = vpop.permute.xlu0 %1447
    %v1450 = vmul.f32 %v1443, %v1448
    %1452 = vrot.lane.b32.xlu0 %v1450, 32
    %v1453 = vpop.permute.xlu0 %1452
    %v1455 = vadd.f32 %v1445, %v1453
    %v1456 = vtanh.pop %v1455
    %1458 = vrot.lane.b32.xlu0 %v1456, 64
    %v1459 = vpop.permute.xlu0 %1458
    %v1461 = vmul.f32 %v1443, %v1459
    %1463 = vset.pattern.permute.xlu0 0
    %1464 = vperm.xlu0 %1463, %v1250
    %v1465 = vpop.permute.xlu0 %1464
    %v1467 = vmul.f32 %v1465, %v1461
    %v1468 = vsub.f32 1.0, %v1250
    %1470 = vset.pattern.permute.xlu0 0
    %1471 = vperm.xlu0 %1470, %v1468
    %v1472 = vpop.permute.xlu0 %1471
    %v1474 = vmul.f32 %v1472, %v1241
    %v1475 = vadd.f32 %v1467, %v1474
    %v1476 = vmul.f32 %v1465, %v1455
    %v1477 = vmul.f32 %v1472, %v1244
    %v1478 = vadd.f32 %v1476, %v1477
    %s1479 = scalar_lea.vmem %s5, 40
    %1480 = vst.msk [vmem:[%s1479] sm:$0xff] %vm64, %v1359
    %s1481 = scalar_lea.vmem %s0, 48
    %v1482 = vld [vmem:[%s1481] sm:$0xff]
    %s1483 = scalar_lea.vmem %s1, 48
    %v1484 = vld [vmem:[%s1483] sm:$0xff]
    %1486 = vrot.lane.b32.xlu0 %v1475, 32
    %v1487 = vpop.permute.xlu0 %1486
    %1489 = vrot.lane.b32.xlu0 %v1356, 64
    %v1490 = vpop.permute.xlu0 %1489
    %v1492 = vsel %vm64, %v1487, %v1490
    %v1494 = vsel %vm66, %v1492, 0
    %1496 = vmatprep.subr.mxu0 0.0
    %1497 = vmatpush1.msra.mxu0 %v37
    %1498 = vmatprep.subr.mxu0 0.0
    %1499 = vmatpush1.msra.mxu0 %v38
    %1500 = vmatprep.subr.mxu0 0.0
    %1501 = vmatpush1.msra.mxu0 %v39
    %1502 = vmatprep.subr.mxu0 0.0
    %1503 = vmatpush1.msra.mxu0 %v40
    %1504 = vmatprep.subr.mxu0 0.0
    %1505 = vmatpush1.msra.mxu0 %v41
    %1506 = vmatprep.subr.mxu0 0.0
    %1507 = vmatpush1.msra.mxu0 %v42
    %1508 = vmatprep.subr.mxu0 0.0
    %1509 = vmatpush1.msra.mxu0 %v43
    %1510 = vmatprep.subr.mxu0 0.0
    %1511 = vmatpush1.msra.mxu0 %v44
    %1512 = vmatprep.subr.mxu0 0.0
    %1513 = vmatpush1.msra.mxu0 0.0
    %1514 = vmatprep.subr.mxu0 0.0
    %1515 = vmatpush1.msra.mxu0 0.0
    %1516 = vmatprep.subr.mxu0 0.0
    %1517 = vmatpush1.msra.mxu0 0.0
    %1518 = vmatprep.subr.mxu0 0.0
    %1519 = vmatpush1.msra.mxu0 0.0
    %1520 = vmatprep.subr.mxu0 0.0
    %1521 = vmatpush1.msra.mxu0 0.0
    %1522 = vmatprep.subr.mxu0 0.0
    %1523 = vmatpush1.msra.mxu0 0.0
    %1524 = vmatprep.subr.mxu0 0.0
    %1525 = vmatpush1.msra.mxu0 0.0
    %1526 = vmatprep.subr.mxu0 0.0
    %1527 = vmatpush1.msra.mxu0 0.0
    %1528 = vmatprep.subr.mxu0 0.0
    %1529 = vmatpush1.msra.mxu0 0.0
    %1530 = vmatprep.subr.mxu0 0.0
    %1531 = vmatpush1.msra.mxu0 0.0
    %1532 = vmatprep.subr.mxu0 0.0
    %1533 = vmatpush1.msra.mxu0 0.0
    %1534 = vmatprep.subr.mxu0 0.0
    %1535 = vmatpush1.msra.mxu0 0.0
    %1536 = vmatprep.subr.mxu0 0.0
    %1537 = vmatpush1.msra.mxu0 0.0
    %1538 = vmatprep.subr.mxu0 0.0
    %1539 = vmatpush1.msra.mxu0 0.0
    %1540 = vmatprep.subr.mxu0 0.0
    %1541 = vmatpush1.msra.mxu0 0.0
    %1542 = vmatprep.subr.mxu0 0.0
    %1543 = vmatpush1.msra.mxu0 0.0
    %1544 = vmatprep.subr.mxu0 0.0
    %1545 = vmatpush1.msra.mxu0 0.0
    %1546 = vmatprep.subr.mxu0 0.0
    %1547 = vmatpush1.msra.mxu0 0.0
    %1548 = vmatprep.subr.mxu0 0.0
    %1549 = vmatpush1.msra.mxu0 0.0
    %1550 = vmatprep.subr.mxu0 0.0
    %1551 = vmatpush1.msra.mxu0 0.0
    %1552 = vmatprep.subr.mxu0 0.0
    %1553 = vmatpush1.msra.mxu0 0.0
    %1554 = vmatprep.subr.mxu0 0.0
    %1555 = vmatpush1.msra.mxu0 0.0
    %1556 = vmatprep.subr.mxu0 0.0
    %1557 = vmatpush1.msra.mxu0 0.0
    %1558 = vmatprep.subr.mxu0 0.0
    %1559 = vmatpush1.msra.mxu0 0.0
    %1560 = vmatprep.mubr.f32.mxu0 0.0
    %1561 = vmatmul.mubr.f32.gmra.mrb[0].mxu0 %v1494
    %v1562 = vpop.f32.mrb[0].mxu0
    %v1563 = vadd.f32 0.0, %v1562
    %v1564 = vpop.f32.mrb[0].mxu0
    %1565 = vdwg.mxu0
    %v1566 = vadd.f32 %v1482, %v1563
    %v1567 = vxor.u32 %v1566, 2147483648
    %v1568 = vmul.f32 %v1567, 1.442695
    %v1569 = vpow.pop %v1568
    %v1570 = vadd.f32 %v1569, 1.0
    %v1571 = vrcp.pop %v1570
    %v1572 = vmul.f32 1.0, %v1571
    %v1573 = vtanh.pop %v1566
    %v1574 = vmul.f32 %v1572, %v1350
    %1576 = vrot.lane.b32.xlu0 %v1573, 64
    %v1577 = vpop.permute.xlu0 %1576
    %v1579 = vmul.f32 %v1572, %v1577
    %1581 = vrot.lane.b32.xlu0 %v1579, 32
    %v1582 = vpop.permute.xlu0 %1581
    %v1584 = vadd.f32 %v1574, %v1582
    %v1585 = vtanh.pop %v1584
    %1587 = vrot.lane.b32.xlu0 %v1585, 64
    %v1588 = vpop.permute.xlu0 %1587
    %v1590 = vmul.f32 %v1572, %v1588
    %1592 = vrot.lane.b32.xlu0 %v1590, 32
    %v1593 = vpop.permute.xlu0 %1592
    %1595 = vrot.lane.b32.xlu0 %v1475, 64
    %v1596 = vpop.permute.xlu0 %1595
    %v1598 = vsel %vm64, %v1593, %v1596
    %v1600 = vsel %vm66, %v1598, 0
    %1602 = vmatprep.subr.mxu0 0.0
    %1603 = vmatpush1.msra.mxu0 %v45
    %1604 = vmatprep.subr.mxu0 0.0
    %1605 = vmatpush1.msra.mxu0 %v46
    %1606 = vmatprep.subr.mxu0 0.0
    %1607 = vmatpush1.msra.mxu0 %v47
    %1608 = vmatprep.subr.mxu0 0.0
    %1609 = vmatpush1.msra.mxu0 %v48
    %1610 = vmatprep.subr.mxu0 0.0
    %1611 = vmatpush1.msra.mxu0 %v49
    %1612 = vmatprep.subr.mxu0 0.0
    %1613 = vmatpush1.msra.mxu0 %v50
    %1614 = vmatprep.subr.mxu0 0.0
    %1615 = vmatpush1.msra.mxu0 %v51
    %1616 = vmatprep.subr.mxu0 0.0
    %1617 = vmatpush1.msra.mxu0 %v52
    %1618 = vmatprep.subr.mxu0 0.0
    %1619 = vmatpush1.msra.mxu0 0.0
    %1620 = vmatprep.subr.mxu0 0.0
    %1621 = vmatpush1.msra.mxu0 0.0
    %1622 = vmatprep.subr.mxu0 0.0
    %1623 = vmatpush1.msra.mxu0 0.0
    %1624 = vmatprep.subr.mxu0 0.0
    %1625 = vmatpush1.msra.mxu0 0.0
    %1626 = vmatprep.subr.mxu0 0.0
    %1627 = vmatpush1.msra.mxu0 0.0
    %1628 = vmatprep.subr.mxu0 0.0
    %1629 = vmatpush1.msra.mxu0 0.0
    %1630 = vmatprep.subr.mxu0 0.0
    %1631 = vmatpush1.msra.mxu0 0.0
    %1632 = vmatprep.subr.mxu0 0.0
    %1633 = vmatpush1.msra.mxu0 0.0
    %1634 = vmatprep.subr.mxu0 0.0
    %1635 = vmatpush1.msra.mxu0 0.0
    %1636 = vmatprep.subr.mxu0 0.0
    %1637 = vmatpush1.msra.mxu0 0.0
    %1638 = vmatprep.subr.mxu0 0.0
    %1639 = vmatpush1.msra.mxu0 0.0
    %1640 = vmatprep.subr.mxu0 0.0
    %1641 = vmatpush1.msra.mxu0 0.0
    %1642 = vmatprep.subr.mxu0 0.0
    %1643 = vmatpush1.msra.mxu0 0.0
    %1644 = vmatprep.subr.mxu0 0.0
    %1645 = vmatpush1.msra.mxu0 0.0
    %1646 = vmatprep.subr.mxu0 0.0
    %1647 = vmatpush1.msra.mxu0 0.0
    %1648 = vmatprep.subr.mxu0 0.0
    %1649 = vmatpush1.msra.mxu0 0.0
    %1650 = vmatprep.subr.mxu0 0.0
    %1651 = vmatpush1.msra.mxu0 0.0
    %1652 = vmatprep.subr.mxu0 0.0
    %1653 = vmatpush1.msra.mxu0 0.0
    %1654 = vmatprep.subr.mxu0 0.0
    %1655 = vmatpush1.msra.mxu0 0.0
    %1656 = vmatprep.subr.mxu0 0.0
    %1657 = vmatpush1.msra.mxu0 0.0
    %1658 = vmatprep.subr.mxu0 0.0
    %1659 = vmatpush1.msra.mxu0 0.0
    %1660 = vmatprep.subr.mxu0 0.0
    %1661 = vmatpush1.msra.mxu0 0.0
    %1662 = vmatprep.subr.mxu0 0.0
    %1663 = vmatpush1.msra.mxu0 0.0
    %1664 = vmatprep.subr.mxu0 0.0
    %1665 = vmatpush1.msra.mxu0 0.0
    %1666 = vmatprep.mubr.f32.mxu0 0.0
    %1667 = vmatmul.mubr.f32.gmra.mrb[0].mxu0 %v1600
    %v1668 = vpop.f32.mrb[0].mxu0
    %v1669 = vadd.f32 %v182, %v1668
    %v1670 = vpop.f32.mrb[0].mxu0
    %1671 = vdwg.mxu0
    %v1672 = vxor.u32 %v1669, 2147483648
    %v1673 = vmul.f32 %v1672, 1.442695
    %v1674 = vpow.pop %v1673
    %v1675 = vadd.f32 %v1674, 1.0
    %v1676 = vrcp.pop %v1675
    %v1677 = vmul.f32 1.0, %v1676
    %v1678 = vtanh.pop %v1669
    %v1679 = vmul.f32 %v1677, %v1478
    %1681 = vrot.lane.b32.xlu0 %v1678, 64
    %v1682 = vpop.permute.xlu0 %1681
    %v1684 = vmul.f32 %v1677, %v1682
    %1686 = vrot.lane.b32.xlu0 %v1684, 32
    %v1687 = vpop.permute.xlu0 %1686
    %v1689 = vadd.f32 %v1679, %v1687
    %v1690 = vtanh.pop %v1689
    %1692 = vrot.lane.b32.xlu0 %v1690, 64
    %v1693 = vpop.permute.xlu0 %1692
    %v1695 = vmul.f32 %v1677, %v1693
    %1697 = vset.pattern.permute.xlu0 0
    %1698 = vperm.xlu0 %1697, %v1484
    %v1699 = vpop.permute.xlu0 %1698
    %v1701 = vmul.f32 %v1699, %v1695
    %v1702 = vsub.f32 1.0, %v1484
    %1704 = vset.pattern.permute.xlu0 0
    %1705 = vperm.xlu0 %1704, %v1702
    %v1706 = vpop.permute.xlu0 %1705
    %v1708 = vmul.f32 %v1706, %v1475
    %v1709 = vadd.f32 %v1701, %v1708
    %v1710 = vmul.f32 %v1699, %v1689
    %v1711 = vmul.f32 %v1706, %v1478
    %v1712 = vadd.f32 %v1710, %v1711
    %s1713 = scalar_lea.vmem %s5, 48
    %1714 = vst.msk [vmem:[%s1713] sm:$0xff] %vm64, %v1593
    %s1715 = scalar_lea.vmem %s0, 56
    %v1716 = vld [vmem:[%s1715] sm:$0xff]
    %s1717 = scalar_lea.vmem %s1, 56
    %v1718 = vld [vmem:[%s1717] sm:$0xff]
    %1720 = vrot.lane.b32.xlu0 %v1709, 32
    %v1721 = vpop.permute.xlu0 %1720
    %1723 = vrot.lane.b32.xlu0 %v1590, 64
    %v1724 = vpop.permute.xlu0 %1723
    %v1726 = vsel %vm64, %v1721, %v1724
    %v1728 = vsel %vm66, %v1726, 0
    %1730 = vmatprep.subr.mxu0 0.0
    %1731 = vmatpush1.msra.mxu0 %v37
    %1732 = vmatprep.subr.mxu0 0.0
    %1733 = vmatpush1.msra.mxu0 %v38
    %1734 = vmatprep.subr.mxu0 0.0
    %1735 = vmatpush1.msra.mxu0 %v39
    %1736 = vmatprep.subr.mxu0 0.0
    %1737 = vmatpush1.msra.mxu0 %v40
    %1738 = vmatprep.subr.mxu0 0.0
    %1739 = vmatpush1.msra.mxu0 %v41
    %1740 = vmatprep.subr.mxu0 0.0
    %1741 = vmatpush1.msra.mxu0 %v42
    %1742 = vmatprep.subr.mxu0 0.0
    %1743 = vmatpush1.msra.mxu0 %v43
    %1744 = vmatprep.subr.mxu0 0.0
    %1745 = vmatpush1.msra.mxu0 %v44
    %1746 = vmatprep.subr.mxu0 0.0
    %1747 = vmatpush1.msra.mxu0 0.0
    %1748 = vmatprep.subr.mxu0 0.0
    %1749 = vmatpush1.msra.mxu0 0.0
    %1750 = vmatprep.subr.mxu0 0.0
    %1751 = vmatpush1.msra.mxu0 0.0
    %1752 = vmatprep.subr.mxu0 0.0
    %1753 = vmatpush1.msra.mxu0 0.0
    %1754 = vmatprep.subr.mxu0 0.0
    %1755 = vmatpush1.msra.mxu0 0.0
    %1756 = vmatprep.subr.mxu0 0.0
    %1757 = vmatpush1.msra.mxu0 0.0
    %1758 = vmatprep.subr.mxu0 0.0
    %1759 = vmatpush1.msra.mxu0 0.0
    %1760 = vmatprep.subr.mxu0 0.0
    %1761 = vmatpush1.msra.mxu0 0.0
    %1762 = vmatprep.subr.mxu0 0.0
    %1763 = vmatpush1.msra.mxu0 0.0
    %1764 = vmatprep.subr.mxu0 0.0
    %1765 = vmatpush1.msra.mxu0 0.0
    %1766 = vmatprep.subr.mxu0 0.0
    %1767 = vmatpush1.msra.mxu0 0.0
    %1768 = vmatprep.subr.mxu0 0.0
    %1769 = vmatpush1.msra.mxu0 0.0
    %1770 = vmatprep.subr.mxu0 0.0
    %1771 = vmatpush1.msra.mxu0 0.0
    %1772 = vmatprep.subr.mxu0 0.0
    %1773 = vmatpush1.msra.mxu0 0.0
    %1774 = vmatprep.subr.mxu0 0.0
    %1775 = vmatpush1.msra.mxu0 0.0
    %1776 = vmatprep.subr.mxu0 0.0
    %1777 = vmatpush1.msra.mxu0 0.0
    %1778 = vmatprep.subr.mxu0 0.0
    %1779 = vmatpush1.msra.mxu0 0.0
    %1780 = vmatprep.subr.mxu0 0.0
    %1781 = vmatpush1.msra.mxu0 0.0
    %1782 = vmatprep.subr.mxu0 0.0
    %1783 = vmatpush1.msra.mxu0 0.0
    %1784 = vmatprep.subr.mxu0 0.0
    %1785 = vmatpush1.msra.mxu0 0.0
    %1786 = vmatprep.subr.mxu0 0.0
    %1787 = vmatpush1.msra.mxu0 0.0
    %1788 = vmatprep.subr.mxu0 0.0
    %1789 = vmatpush1.msra.mxu0 0.0
    %1790 = vmatprep.subr.mxu0 0.0
    %1791 = vmatpush1.msra.mxu0 0.0
    %1792 = vmatprep.subr.mxu0 0.0
    %1793 = vmatpush1.msra.mxu0 0.0
    %1794 = vmatprep.mubr.f32.mxu0 0.0
    %1795 = vmatmul.mubr.f32.gmra.mrb[0].mxu0 %v1728
    %v1796 = vpop.f32.mrb[0].mxu0
    %v1797 = vadd.f32 0.0, %v1796
    %v1798 = vpop.f32.mrb[0].mxu0
    %1799 = vdwg.mxu0
    %v1800 = vadd.f32 %v1716, %v1797
    %v1801 = vxor.u32 %v1800, 2147483648
    %v1802 = vmul.f32 %v1801, 1.442695
    %v1803 = vpow.pop %v1802
    %v1804 = vadd.f32 %v1803, 1.0
    %v1805 = vrcp.pop %v1804
    %v1806 = vmul.f32 1.0, %v1805
    %v1807 = vtanh.pop %v1800
    %v1808 = vmul.f32 %v1806, %v1584
    %1810 = vrot.lane.b32.xlu0 %v1807, 64
    %v1811 = vpop.permute.xlu0 %1810
    %v1813 = vmul.f32 %v1806, %v1811
    %1815 = vrot.lane.b32.xlu0 %v1813, 32
    %v1816 = vpop.permute.xlu0 %1815
    %v1818 = vadd.f32 %v1808, %v1816
    %v1819 = vtanh.pop %v1818
    %1821 = vrot.lane.b32.xlu0 %v1819, 64
    %v1822 = vpop.permute.xlu0 %1821
    %v1824 = vmul.f32 %v1806, %v1822
    %1826 = vrot.lane.b32.xlu0 %v1824, 32
    %v1827 = vpop.permute.xlu0 %1826
    %1829 = vrot.lane.b32.xlu0 %v1709, 64
    %v1830 = vpop.permute.xlu0 %1829
    %v1832 = vsel %vm64, %v1827, %v1830
    %v1834 = vsel %vm66, %v1832, 0
    %1836 = vmatprep.subr.mxu0 0.0
    %1837 = vmatpush1.msra.mxu0 %v45
    %1838 = vmatprep.subr.mxu0 0.0
    %1839 = vmatpush1.msra.mxu0 %v46
    %1840 = vmatprep.subr.mxu0 0.0
    %1841 = vmatpush1.msra.mxu0 %v47
    %1842 = vmatprep.subr.mxu0 0.0
    %1843 = vmatpush1.msra.mxu0 %v48
    %1844 = vmatprep.subr.mxu0 0.0
    %1845 = vmatpush1.msra.mxu0 %v49
    %1846 = vmatprep.subr.mxu0 0.0
    %1847 = vmatpush1.msra.mxu0 %v50
    %1848 = vmatprep.subr.mxu0 0.0
    %1849 = vmatpush1.msra.mxu0 %v51
    %1850 = vmatprep.subr.mxu0 0.0
    %1851 = vmatpush1.msra.mxu0 %v52
    %1852 = vmatprep.subr.mxu0 0.0
    %1853 = vmatpush1.msra.mxu0 0.0
    %1854 = vmatprep.subr.mxu0 0.0
    %1855 = vmatpush1.msra.mxu0 0.0
    %1856 = vmatprep.subr.mxu0 0.0
    %1857 = vmatpush1.msra.mxu0 0.0
    %1858 = vmatprep.subr.mxu0 0.0
    %1859 = vmatpush1.msra.mxu0 0.0
    %1860 = vmatprep.subr.mxu0 0.0
    %1861 = vmatpush1.msra.mxu0 0.0
    %1862 = vmatprep.subr.mxu0 0.0
    %1863 = vmatpush1.msra.mxu0 0.0
    %1864 = vmatprep.subr.mxu0 0.0
    %1865 = vmatpush1.msra.mxu0 0.0
    %1866 = vmatprep.subr.mxu0 0.0
    %1867 = vmatpush1.msra.mxu0 0.0
    %1868 = vmatprep.subr.mxu0 0.0
    %1869 = vmatpush1.msra.mxu0 0.0
    %1870 = vmatprep.subr.mxu0 0.0
    %1871 = vmatpush1.msra.mxu0 0.0
    %1872 = vmatprep.subr.mxu0 0.0
    %1873 = vmatpush1.msra.mxu0 0.0
    %1874 = vmatprep.subr.mxu0 0.0
    %1875 = vmatpush1.msra.mxu0 0.0
    %1876 = vmatprep.subr.mxu0 0.0
    %1877 = vmatpush1.msra.mxu0 0.0
    %1878 = vmatprep.subr.mxu0 0.0
    %1879 = vmatpush1.msra.mxu0 0.0
    %1880 = vmatprep.subr.mxu0 0.0
    %1881 = vmatpush1.msra.mxu0 0.0
    %1882 = vmatprep.subr.mxu0 0.0
    %1883 = vmatpush1.msra.mxu0 0.0
    %1884 = vmatprep.subr.mxu0 0.0
    %1885 = vmatpush1.msra.mxu0 0.0
    %1886 = vmatprep.subr.mxu0 0.0
    %1887 = vmatpush1.msra.mxu0 0.0
    %1888 = vmatprep.subr.mxu0 0.0
    %1889 = vmatpush1.msra.mxu0 0.0
    %1890 = vmatprep.subr.mxu0 0.0
    %1891 = vmatpush1.msra.mxu0 0.0
    %1892 = vmatprep.subr.mxu0 0.0
    %1893 = vmatpush1.msra.mxu0 0.0
    %1894 = vmatprep.subr.mxu0 0.0
    %1895 = vmatpush1.msra.mxu0 0.0
    %1896 = vmatprep.subr.mxu0 0.0
    %1897 = vmatpush1.msra.mxu0 0.0
    %1898 = vmatprep.subr.mxu0 0.0
    %1899 = vmatpush1.msra.mxu0 0.0
    %1900 = vmatprep.mubr.f32.mxu0 0.0
    %1901 = vmatmul.mubr.f32.gmra.mrb[0].mxu0 %v1834
    %v1902 = vpop.f32.mrb[0].mxu0
    %v1903 = vadd.f32 %v182, %v1902
    %v1904 = vpop.f32.mrb[0].mxu0
    %1905 = vdwg.mxu0
    %v1906 = vxor.u32 %v1903, 2147483648
    %v1907 = vmul.f32 %v1906, 1.442695
    %v1908 = vpow.pop %v1907
    %v1909 = vadd.f32 %v1908, 1.0
    %v1910 = vrcp.pop %v1909
    %v1911 = vmul.f32 1.0, %v1910
    %v1912 = vtanh.pop %v1903
    %v1913 = vmul.f32 %v1911, %v1712
    %1915 = vrot.lane.b32.xlu0 %v1912, 64
    %v1916 = vpop.permute.xlu0 %1915
    %v1918 = vmul.f32 %v1911, %v1916
    %1920 = vrot.lane.b32.xlu0 %v1918, 32
    %v1921 = vpop.permute.xlu0 %1920
    %v1923 = vadd.f32 %v1913, %v1921
    %v1924 = vtanh.pop %v1923
    %1926 = vrot.lane.b32.xlu0 %v1924, 64
    %v1927 = vpop.permute.xlu0 %1926
    %v1929 = vmul.f32 %v1911, %v1927
    %1931 = vset.pattern.permute.xlu0 0
    %1932 = vperm.xlu0 %1931, %v1718
    %v1933 = vpop.permute.xlu0 %1932
    %v1935 = vmul.f32 %v1933, %v1929
    %v1936 = vsub.f32 1.0, %v1718
    %1938 = vset.pattern.permute.xlu0 0
    %1939 = vperm.xlu0 %1938, %v1936
    %v1940 = vpop.permute.xlu0 %1939
    %v1942 = vmul.f32 %v1940, %v1709
    %v1943 = vadd.f32 %v1935, %v1942
    %v1944 = vmul.f32 %v1933, %v1923
    %v1945 = vmul.f32 %v1940, %v1712
    %v1946 = vadd.f32 %v1944, %v1945
    %s1947 = scalar_lea.vmem %s5, 56
    %1948 = vst.msk [vmem:[%s1947] sm:$0xff] %vm64, %v1827
    %1949 = vst.msk [vmem:[#allocation2] sm:$0xff] %vm64, %v1827
    %1951 = vrot.lane.b32.xlu0 %v1818, 96
    %v1952 = vpop.permute.xlu0 %1951
    %1954 = vst.msk [vmem:[#allocation4] sm:$0xff] %vm64, %v1952
    %1956 = vrot.lane.b32.xlu0 %v1943, 32
    %v1957 = vpop.permute.xlu0 %1956
    %1959 = vst.msk [vmem:[#allocation6] sm:$0xff] %vm64, %v1957
    %1961 = vrot.lane.b32.xlu0 %v1946, 96
    %v1962 = vpop.permute.xlu0 %1961
    %1964 = vst.msk [vmem:[#allocation7] sm:$0xff] %vm64, %v1962
    // Predicated region
    $region26: #{hrnn_forward.1} parent=1 // pred_check
      _
    $region27: #{hrnn_forward.1} parent=1 // pred_check_branch
      %1966 = sbr.rel (0) target = $region29
    $region28: #{hrnn_forward.1} parent=1 // pred_region
      _
    $region29: #{hrnn_forward.1} parent=1 // pred_fallthru
      _
    // Predicated region
    $region30: #{hrnn_forward.1} parent=1 // pred_check
      _
    $region31: #{hrnn_forward.1} parent=1 // pred_check_branch
      %1968 = sbr.rel (0) target = $region33
    $region32: #{hrnn_forward.1} parent=1 // pred_region
      %s1970 = ssub.s32 128, 128
      %1971 = vsyncadd [#allocation3], %s1970
      %s1973 = sshll.u32 [#allocation2], 4
      %s1974 = int_to_ptr.vmem [resolvable:$true] %s1973
      %1976 = dma.vmem_to_hbm [thread:$0]  %s1974, 128, %s6, [#allocation3]
    $region33: #{hrnn_forward.1} parent=1 // pred_fallthru
      _
    // Predicated region
    $region34: #{hrnn_forward.1} parent=1 // pred_check
      _
    $region35: #{hrnn_forward.1} parent=1 // pred_check_branch
      %1978 = sbr.rel (0) target = $region37
    $region36: #{hrnn_forward.1} parent=1 // pred_region
      %s1980 = ssub.s32 128, 128
      %1981 = vsyncadd [#allocation5], %s1980
      %s1983 = sshll.u32 [#allocation4], 4
      %s1984 = int_to_ptr.vmem [resolvable:$true] %s1983
      %1986 = dma.vmem_to_hbm [thread:$0]  %s1984, 128, %s7, [#allocation5]
    $region37: #{hrnn_forward.1} parent=1 // pred_fallthru
      _
    // Predicated region
    $region38: #{hrnn_forward.1} parent=1 // pred_check
      _
    $region39: #{hrnn_forward.1} parent=1 // pred_check_branch
      %1988 = sbr.rel (0) target = $region41
    $region40: #{hrnn_forward.1} parent=1 // pred_region
      %s1990 = ssub.s32 128, 128
      %1991 = vsyncadd [#allocation5], %s1990
      %s1993 = sshll.u32 [#allocation6], 4
      %s1994 = int_to_ptr.vmem [resolvable:$true] %s1993
      %1996 = dma.vmem_to_hbm [thread:$0]  %s1994, 128, %s8, [#allocation5]
    $region41: #{hrnn_forward.1} parent=1 // pred_fallthru
      _
    // Predicated region
    $region42: #{hrnn_forward.1} parent=1 // pred_check
      _
    $region43: #{hrnn_forward.1} parent=1 // pred_check_branch
      %1998 = sbr.rel (0) target = $region45
    $region44: #{hrnn_forward.1} parent=1 // pred_region
      %s2000 = ssub.s32 128, 128
      %2001 = vsyncadd [#allocation8], %s2000
      %s2003 = sshll.u32 [#allocation7], 4
      %s2004 = int_to_ptr.vmem [resolvable:$true] %s2003
      %2006 = dma.vmem_to_hbm [thread:$0]  %s2004, 128, %s9, [#allocation8]
    $region45: #{hrnn_forward.1} parent=1 // pred_fallthru
      _
    // Predicated region
    $region46: #{hrnn_forward.1} parent=1 // pred_check
      _
    $region47: #{hrnn_forward.1} parent=1 // pred_check_branch
      %2008 = sbr.rel (0) target = $region49
    $region48: #{hrnn_forward.1} parent=1 // pred_region
      _
    $region49: #{hrnn_forward.1} parent=1 // pred_fallthru
      _
    // Predicated region
    $region50: #{hrnn_forward.1} parent=1 // pred_check
      _
    $region51: #{hrnn_forward.1} parent=1 // pred_check_branch
      %2010 = sbr.rel (0) target = $region53
    $region52: #{hrnn_forward.1} parent=1 // pred_region
      %2011 = dma.done [#allocation3], 128
    $region53: #{hrnn_forward.1} parent=1 // pred_fallthru
      _
    // Predicated region
    $region54: #{hrnn_forward.1} parent=1 // pred_check
      _
    $region55: #{hrnn_forward.1} parent=1 // pred_check_branch
      %2013 = sbr.rel (0) target = $region57
    $region56: #{hrnn_forward.1} parent=1 // pred_region
      %2014 = dma.done [#allocation5], 128
    $region57: #{hrnn_forward.1} parent=1 // pred_fallthru
      _
    // Predicated region
    $region58: #{hrnn_forward.1} parent=1 // pred_check
      _
    $region59: #{hrnn_forward.1} parent=1 // pred_check_branch
      %2016 = sbr.rel (0) target = $region61
    $region60: #{hrnn_forward.1} parent=1 // pred_region
      %2017 = dma.done [#allocation5], 128
    $region61: #{hrnn_forward.1} parent=1 // pred_fallthru
      _
    // Predicated region
    $region62: #{hrnn_forward.1} parent=1 // pred_check
      _
    $region63: #{hrnn_forward.1} parent=1 // pred_check_branch
      %2019 = sbr.rel (0) target = $region65
    $region64: #{hrnn_forward.1} parent=1 // pred_region
      %2020 = dma.done [#allocation8], 128
    $region65: #{hrnn_forward.1} parent=1 // pred_fallthru
      _
    %2021 = vsyncpa [#allocation3], 1
    %2022 = vsyncpa [#allocation5], 1
    %2023 = vsyncpa [#allocation8], 1

</llo_original>
